<compile_context>
chip_gen: v7x
topology: tpu7x:2x2x1
jax: 0.10.0
libtpu: 0.0.40
codegen_flags: <defaults>
</compile_context>

<pallas_src>
import functools

import jax
import jax.numpy as jnp
from jax.experimental import pallas as pl
from jax.experimental.pallas import tpu as pltpu


def _dwsep_kernel(x_ref, dw_ref, pw_ref, out_ref, xpad_ref, *,
                  C_in, C_out, H, W, K):
    # x_ref   : (1, C_in, H*W)        input image, row-major flattened spatial
    # dw_ref  : (C_in, K*K)           depthwise weights (VMEM)
    # pw_ref  : (C_out, C_in)         pointwise weights (VMEM, fed to the MXU)
    # out_ref : (1, C_out, H*W)       lane-dense output block
    # xpad_ref: (C_in, Hp*Wp + K-1)   zero-padded image scratch, flat with row stride Wp
    pad = K // 2
    Wp = W + 2 * pad
    L = H * Wp                         # flat accumulation length (stride-Wp rows)

    # ---- zero the halo and copy the image into the padded scratch (upcast once) ----
    xpad_ref[...] = jnp.zeros_like(xpad_ref)
    for h in range(H):
        dst = (h + pad) * Wp + pad
        xpad_ref[:, dst:dst + W] = x_ref[0, :, h * W:(h + 1) * W].astype(jnp.float32)

    # ---- depthwise conv: K*K shifted multiply-accumulates, channels vectorised ----
    dw = dw_ref[...].astype(jnp.float32)               # (C_in, K*K), 1 vreg-ish
    acc = jnp.zeros((C_in, L), jnp.float32)
    for kh in range(K):
        for kw in range(K):
            t = kh * K + kw
            off = kh * Wp + kw                          # uniform flat shift for this tap
            w_col = dw[:, t:t + 1]                      # (C_in, 1) per-channel weight
            acc = acc + w_col * xpad_ref[:, off:off + L]
    # Columns m with (m % Wp) >= W hold horizontally-wrapped junk; dropped at store time.

    # ---- 1x1 pointwise conv: single MXU matmul with f32 accumulation ----
    y = jnp.dot(pw_ref[...].astype(jnp.float32), acc,
                preferred_element_type=jnp.float32)     # (C_out, L)

    # ---- drop the Wp-stride junk columns, store lane-dense (1, C_out, H*W) ----
    for h in range(H):
        out_ref[0, :, h * W:(h + 1) * W] = (
            y[:, h * Wp:h * Wp + W].astype(out_ref.dtype))


def depthwise_separable_conv2d(x, dw_w, pw_w):
    """x: (B, C_in, H, W); dw_w: (C_in, 1, K, K); pw_w: (C_out, C_in, 1, 1)."""
    B, C_in, H, W = x.shape
    K = dw_w.shape[-1]
    assert dw_w.shape == (C_in, 1, K, K) and K % 2 == 1, "odd square depthwise kernel"
    C_out = pw_w.shape[0]
    assert pw_w.shape == (C_out, C_in, 1, 1)

    pad = K // 2
    Hp, Wp = H + 2 * pad, W + 2 * pad
    L_in = Hp * Wp + (K - 1)           # flat padded length incl. the last-tap overrun

    x_flat = x.reshape(B, C_in, H * W)                  # free reshape of minor dims
    dw2 = dw_w.reshape(C_in, K * K)
    pw2 = pw_w.reshape(C_out, C_in)

    kernel = functools.partial(_dwsep_kernel, C_in=C_in, C_out=C_out, H=H, W=W, K=K)
    out_flat = pl.pallas_call(
        kernel,
        out_shape=jax.ShapeDtypeStruct((B, C_out, H * W), x.dtype),
        grid=(B,),
        in_specs=[
            pl.BlockSpec((1, C_in, H * W), lambda b: (b, 0, 0)),
            pl.BlockSpec((C_in, K * K), lambda b: (0, 0)),
            pl.BlockSpec((C_out, C_in), lambda b: (0, 0)),
        ],
        out_specs=pl.BlockSpec((1, C_out, H * W), lambda b: (b, 0, 0)),
        scratch_shapes=[pltpu.VMEM((C_in, L_in), jnp.float32)],
        compiler_params=pltpu.CompilerParams(
            dimension_semantics=("parallel",),
            vmem_limit_bytes=32 * 1024 * 1024),
    )(x_flat, dw2, pw2)
    return out_flat.reshape(B, C_out, H, W)


if __name__ == "__main__":
    B, C_in, C_out, H, W, K = 2, 4, 8, 16, 16, 7

    key = jax.random.PRNGKey(0)
    k1, k2, k3 = jax.random.split(key, 3)
    x = jax.random.normal(k1, (B, C_in, H, W), jnp.float32)
    dw_w = 0.1 * jax.random.normal(k2, (C_in, 1, K, K), jnp.float32)   # depthwise weight
    pw_w = 0.1 * jax.random.normal(k3, (C_out, C_in, 1, 1), jnp.float32)  # pointwise weight

    out = depthwise_separable_conv2d(x, dw_w, pw_w)
    jax.block_until_ready(out)
    assert out.shape == (B, C_out, H, W) and out.dtype == jnp.float32

    # Pure-JAX reference (elementwise f32, no MXU) for a sanity check.
    pad = K // 2
    xp = jnp.pad(x, ((0, 0), (0, 0), (pad, pad), (pad, pad)))
    dwout = jnp.zeros((B, C_in, H, W), jnp.float32)
    for kh in range(K):
        for kw in range(K):
            w_tap = dw_w[:, 0, kh, kw][None, :, None, None]
            dwout = dwout + w_tap * xp[:, :, kh:kh + H, kw:kw + W]
    pw2d = pw_w[:, :, 0, 0]                                            # (C_out, C_in)
    ref = (pw2d[None, :, :, None, None] * dwout[:, None, :, :, :]).sum(axis=2)

    max_err = float(jnp.max(jnp.abs(out - ref)))
    assert max_err < 5e-3, f"max abs err {max_err}"
    print("KERNEL_OK")
</pallas_src>

<mosaic_0001>
module attributes {stable_mosaic.version = 11 : i64} {
  func.func @_dwsep_kernel(%arg0: i32, %arg1: memref<1x4x256xf32, #tpu.memory_space<vmem>>, %arg2: memref<4x49xf32, #tpu.memory_space<vmem>>, %arg3: memref<8x4xf32, #tpu.memory_space<vmem>>, %arg4: memref<1x8x256xf32, #tpu.memory_space<vmem>>, %arg5: memref<4x490xf32, #tpu.memory_space<vmem>>) attributes {dimension_semantics = [#tpu.dimension_semantics<parallel>], iteration_bounds = array<i64: 2>, scalar_prefetch = 0 : i64, scratch_operands = 1 : i64, tpu.core_type = #tpu.core_type<tc>, window_params = [{transform_indices = @transform_0, window_bounds = array<i64: 1, 4, 256>}, {pipeline_mode = #tpu.pipeline_mode<synchronous>, transform_indices = @transform_1, window_bounds = array<i64: 4, 49>}, {pipeline_mode = #tpu.pipeline_mode<synchronous>, transform_indices = @transform_2, window_bounds = array<i64: 8, 4>}, {transform_indices = @transform_3, window_bounds = array<i64: 1, 8, 256>}]} {
    %cst = arith.constant 0.000000e+00 : f32
    %0 = vector.broadcast %cst : f32 to vector<4x490xf32>
    %c0 = arith.constant 0 : index
    %c0_0 = arith.constant 0 : index
    %1 = vector.load %arg5[%c0, %c0_0] : memref<4x490xf32, #tpu.memory_space<vmem>>, vector<4x490xf32>
    tpu.vector_store %arg5[%c0, %c0_0], %0 {strides = array<i32>} : memref<4x490xf32, #tpu.memory_space<vmem>>, vector<4x490xf32>,
    %c0_1 = arith.constant 0 : index
    %c0_2 = arith.constant 0 : index
    %c0_3 = arith.constant 0 : index
    %2 = vector.load %arg1[%c0_1, %c0_2, %c0_3] : memref<1x4x256xf32, #tpu.memory_space<vmem>>, vector<1x4x16xf32>
    %3 = vector.shape_cast %2 : vector<1x4x16xf32> to vector<4x16xf32>
    %c0_4 = arith.constant 0 : index
    %c69 = arith.constant 69 : index
    %4 = vector.load %arg5[%c0_4, %c69] : memref<4x490xf32, #tpu.memory_space<vmem>>, vector<4x16xf32>
    tpu.vector_store %arg5[%c0_4, %c69], %3 {strides = array<i32>} : memref<4x490xf32, #tpu.memory_space<vmem>>, vector<4x16xf32>,
    %c0_5 = arith.constant 0 : index
    %c0_6 = arith.constant 0 : index
    %c16 = arith.constant 16 : index
    %5 = vector.load %arg1[%c0_5, %c0_6, %c16] : memref<1x4x256xf32, #tpu.memory_space<vmem>>, vector<1x4x16xf32>
    %6 = vector.shape_cast %5 : vector<1x4x16xf32> to vector<4x16xf32>
    %c0_7 = arith.constant 0 : index
    %c91 = arith.constant 91 : index
    %7 = vector.load %arg5[%c0_7, %c91] : memref<4x490xf32, #tpu.memory_space<vmem>>, vector<4x16xf32>
    tpu.vector_store %arg5[%c0_7, %c91], %6 {strides = array<i32>} : memref<4x490xf32, #tpu.memory_space<vmem>>, vector<4x16xf32>,
    %c0_8 = arith.constant 0 : index
    %c0_9 = arith.constant 0 : index
    %c32 = arith.constant 32 : index
    %8 = vector.load %arg1[%c0_8, %c0_9, %c32] : memref<1x4x256xf32, #tpu.memory_space<vmem>>, vector<1x4x16xf32>
    %9 = vector.shape_cast %8 : vector<1x4x16xf32> to vector<4x16xf32>
    %c0_10 = arith.constant 0 : index
    %c113 = arith.constant 113 : index
    %10 = vector.load %arg5[%c0_10, %c113] : memref<4x490xf32, #tpu.memory_space<vmem>>, vector<4x16xf32>
    tpu.vector_store %arg5[%c0_10, %c113], %9 {strides = array<i32>} : memref<4x490xf32, #tpu.memory_space<vmem>>, vector<4x16xf32>,
    %c0_11 = arith.constant 0 : index
    %c0_12 = arith.constant 0 : index
    %c48 = arith.constant 48 : index
    %11 = vector.load %arg1[%c0_11, %c0_12, %c48] : memref<1x4x256xf32, #tpu.memory_space<vmem>>, vector<1x4x16xf32>
    %12 = vector.shape_cast %11 : vector<1x4x16xf32> to vector<4x16xf32>
    %c0_13 = arith.constant 0 : index
    %c135 = arith.constant 135 : index
    %13 = vector.load %arg5[%c0_13, %c135] : memref<4x490xf32, #tpu.memory_space<vmem>>, vector<4x16xf32>
    tpu.vector_store %arg5[%c0_13, %c135], %12 {strides = array<i32>} : memref<4x490xf32, #tpu.memory_space<vmem>>, vector<4x16xf32>,
    %c0_14 = arith.constant 0 : index
    %c0_15 = arith.constant 0 : index
    %c64 = arith.constant 64 : index
    %14 = vector.load %arg1[%c0_14, %c0_15, %c64] : memref<1x4x256xf32, #tpu.memory_space<vmem>>, vector<1x4x16xf32>
    %15 = vector.shape_cast %14 : vector<1x4x16xf32> to vector<4x16xf32>
    %c0_16 = arith.constant 0 : index
    %c157 = arith.constant 157 : index
    %16 = vector.load %arg5[%c0_16, %c157] : memref<4x490xf32, #tpu.memory_space<vmem>>, vector<4x16xf32>
    tpu.vector_store %arg5[%c0_16, %c157], %15 {strides = array<i32>} : memref<4x490xf32, #tpu.memory_space<vmem>>, vector<4x16xf32>,
    %c0_17 = arith.constant 0 : index
    %c0_18 = arith.constant 0 : index
    %c80 = arith.constant 80 : index
    %17 = vector.load %arg1[%c0_17, %c0_18, %c80] : memref<1x4x256xf32, #tpu.memory_space<vmem>>, vector<1x4x16xf32>
    %18 = vector.shape_cast %17 : vector<1x4x16xf32> to vector<4x16xf32>
    %c0_19 = arith.constant 0 : index
    %c179 = arith.constant 179 : index
    %19 = vector.load %arg5[%c0_19, %c179] : memref<4x490xf32, #tpu.memory_space<vmem>>, vector<4x16xf32>
    tpu.vector_store %arg5[%c0_19, %c179], %18 {strides = array<i32>} : memref<4x490xf32, #tpu.memory_space<vmem>>, vector<4x16xf32>,
    %c0_20 = arith.constant 0 : index
    %c0_21 = arith.constant 0 : index
    %c96 = arith.constant 96 : index
    %20 = vector.load %arg1[%c0_20, %c0_21, %c96] : memref<1x4x256xf32, #tpu.memory_space<vmem>>, vector<1x4x16xf32>
    %21 = vector.shape_cast %20 : vector<1x4x16xf32> to vector<4x16xf32>
    %c0_22 = arith.constant 0 : index
    %c201 = arith.constant 201 : index
    %22 = vector.load %arg5[%c0_22, %c201] : memref<4x490xf32, #tpu.memory_space<vmem>>, vector<4x16xf32>
    tpu.vector_store %arg5[%c0_22, %c201], %21 {strides = array<i32>} : memref<4x490xf32, #tpu.memory_space<vmem>>, vector<4x16xf32>,
    %c0_23 = arith.constant 0 : index
    %c0_24 = arith.constant 0 : index
    %c112 = arith.constant 112 : index
    %23 = vector.load %arg1[%c0_23, %c0_24, %c112] : memref<1x4x256xf32, #tpu.memory_space<vmem>>, vector<1x4x16xf32>
    %24 = vector.shape_cast %23 : vector<1x4x16xf32> to vector<4x16xf32>
    %c0_25 = arith.constant 0 : index
    %c223 = arith.constant 223 : index
    %25 = vector.load %arg5[%c0_25, %c223] : memref<4x490xf32, #tpu.memory_space<vmem>>, vector<4x16xf32>
    tpu.vector_store %arg5[%c0_25, %c223], %24 {strides = array<i32>} : memref<4x490xf32, #tpu.memory_space<vmem>>, vector<4x16xf32>,
    %c0_26 = arith.constant 0 : index
    %c0_27 = arith.constant 0 : index
    %c128 = arith.constant 128 : index
    %26 = vector.load %arg1[%c0_26, %c0_27, %c128] : memref<1x4x256xf32, #tpu.memory_space<vmem>>, vector<1x4x16xf32>
    %27 = vector.shape_cast %26 : vector<1x4x16xf32> to vector<4x16xf32>
    %c0_28 = arith.constant 0 : index
    %c245 = arith.constant 245 : index
    %28 = vector.load %arg5[%c0_28, %c245] : memref<4x490xf32, #tpu.memory_space<vmem>>, vector<4x16xf32>
    tpu.vector_store %arg5[%c0_28, %c245], %27 {strides = array<i32>} : memref<4x490xf32, #tpu.memory_space<vmem>>, vector<4x16xf32>,
    %c0_29 = arith.constant 0 : index
    %c0_30 = arith.constant 0 : index
    %c144 = arith.constant 144 : index
    %29 = vector.load %arg1[%c0_29, %c0_30, %c144] : memref<1x4x256xf32, #tpu.memory_space<vmem>>, vector<1x4x16xf32>
    %30 = vector.shape_cast %29 : vector<1x4x16xf32> to vector<4x16xf32>
    %c0_31 = arith.constant 0 : index
    %c267 = arith.constant 267 : index
    %31 = vector.load %arg5[%c0_31, %c267] : memref<4x490xf32, #tpu.memory_space<vmem>>, vector<4x16xf32>
    tpu.vector_store %arg5[%c0_31, %c267], %30 {strides = array<i32>} : memref<4x490xf32, #tpu.memory_space<vmem>>, vector<4x16xf32>,
    %c0_32 = arith.constant 0 : index
    %c0_33 = arith.constant 0 : index
    %c160 = arith.constant 160 : index
    %32 = vector.load %arg1[%c0_32, %c0_33, %c160] : memref<1x4x256xf32, #tpu.memory_space<vmem>>, vector<1x4x16xf32>
    %33 = vector.shape_cast %32 : vector<1x4x16xf32> to vector<4x16xf32>
    %c0_34 = arith.constant 0 : index
    %c289 = arith.constant 289 : index
    %34 = vector.load %arg5[%c0_34, %c289] : memref<4x490xf32, #tpu.memory_space<vmem>>, vector<4x16xf32>
    tpu.vector_store %arg5[%c0_34, %c289], %33 {strides = array<i32>} : memref<4x490xf32, #tpu.memory_space<vmem>>, vector<4x16xf32>,
    %c0_35 = arith.constant 0 : index
    %c0_36 = arith.constant 0 : index
    %c176 = arith.constant 176 : index
    %35 = vector.load %arg1[%c0_35, %c0_36, %c176] : memref<1x4x256xf32, #tpu.memory_space<vmem>>, vector<1x4x16xf32>
    %36 = vector.shape_cast %35 : vector<1x4x16xf32> to vector<4x16xf32>
    %c0_37 = arith.constant 0 : index
    %c311 = arith.constant 311 : index
    %37 = vector.load %arg5[%c0_37, %c311] : memref<4x490xf32, #tpu.memory_space<vmem>>, vector<4x16xf32>
    tpu.vector_store %arg5[%c0_37, %c311], %36 {strides = array<i32>} : memref<4x490xf32, #tpu.memory_space<vmem>>, vector<4x16xf32>,
    %c0_38 = arith.constant 0 : index
    %c0_39 = arith.constant 0 : index
    %c192 = arith.constant 192 : index
    %38 = vector.load %arg1[%c0_38, %c0_39, %c192] : memref<1x4x256xf32, #tpu.memory_space<vmem>>, vector<1x4x16xf32>
    %39 = vector.shape_cast %38 : vector<1x4x16xf32> to vector<4x16xf32>
    %c0_40 = arith.constant 0 : index
    %c333 = arith.constant 333 : index
    %40 = vector.load %arg5[%c0_40, %c333] : memref<4x490xf32, #tpu.memory_space<vmem>>, vector<4x16xf32>
    tpu.vector_store %arg5[%c0_40, %c333], %39 {strides = array<i32>} : memref<4x490xf32, #tpu.memory_space<vmem>>, vector<4x16xf32>,
    %c0_41 = arith.constant 0 : index
    %c0_42 = arith.constant 0 : index
    %c208 = arith.constant 208 : index
    %41 = vector.load %arg1[%c0_41, %c0_42, %c208] : memref<1x4x256xf32, #tpu.memory_space<vmem>>, vector<1x4x16xf32>
    %42 = vector.shape_cast %41 : vector<1x4x16xf32> to vector<4x16xf32>
    %c0_43 = arith.constant 0 : index
    %c355 = arith.constant 355 : index
    %43 = vector.load %arg5[%c0_43, %c355] : memref<4x490xf32, #tpu.memory_space<vmem>>, vector<4x16xf32>
    tpu.vector_store %arg5[%c0_43, %c355], %42 {strides = array<i32>} : memref<4x490xf32, #tpu.memory_space<vmem>>, vector<4x16xf32>,
    %c0_44 = arith.constant 0 : index
    %c0_45 = arith.constant 0 : index
    %c224 = arith.constant 224 : index
    %44 = vector.load %arg1[%c0_44, %c0_45, %c224] : memref<1x4x256xf32, #tpu.memory_space<vmem>>, vector<1x4x16xf32>
    %45 = vector.shape_cast %44 : vector<1x4x16xf32> to vector<4x16xf32>
    %c0_46 = arith.constant 0 : index
    %c377 = arith.constant 377 : index
    %46 = vector.load %arg5[%c0_46, %c377] : memref<4x490xf32, #tpu.memory_space<vmem>>, vector<4x16xf32>
    tpu.vector_store %arg5[%c0_46, %c377], %45 {strides = array<i32>} : memref<4x490xf32, #tpu.memory_space<vmem>>, vector<4x16xf32>,
    %c0_47 = arith.constant 0 : index
    %c0_48 = arith.constant 0 : index
    %c240 = arith.constant 240 : index
    %47 = vector.load %arg1[%c0_47, %c0_48, %c240] : memref<1x4x256xf32, #tpu.memory_space<vmem>>, vector<1x4x16xf32>
    %48 = vector.shape_cast %47 : vector<1x4x16xf32> to vector<4x16xf32>
    %c0_49 = arith.constant 0 : index
    %c399 = arith.constant 399 : index
    %49 = vector.load %arg5[%c0_49, %c399] : memref<4x490xf32, #tpu.memory_space<vmem>>, vector<4x16xf32>
    tpu.vector_store %arg5[%c0_49, %c399], %48 {strides = array<i32>} : memref<4x490xf32, #tpu.memory_space<vmem>>, vector<4x16xf32>,
    %c0_50 = arith.constant 0 : index
    %c0_51 = arith.constant 0 : index
    %50 = vector.load %arg2[%c0_50, %c0_51] : memref<4x49xf32, #tpu.memory_space<vmem>>, vector<4x49xf32>
    %cst_52 = arith.constant 0.000000e+00 : f32
    %51 = vector.broadcast %cst_52 : f32 to vector<4x352xf32>
    %52 = vector.extract_strided_slice %50 {offsets = [0, 0], sizes = [4, 1], strides = [1, 1]} : vector<4x49xf32> to vector<4x1xf32>
    %c0_53 = arith.constant 0 : index
    %c0_54 = arith.constant 0 : index
    %53 = vector.load %arg5[%c0_53, %c0_54] : memref<4x490xf32, #tpu.memory_space<vmem>>, vector<4x352xf32>
    %54 = vector.broadcast %52 : vector<4x1xf32> to vector<4x352xf32>
    %55 = arith.mulf %54, %53 : vector<4x352xf32>
    %56 = arith.addf %51, %55 : vector<4x352xf32>
    %57 = vector.extract_strided_slice %50 {offsets = [0, 1], sizes = [4, 1], strides = [1, 1]} : vector<4x49xf32> to vector<4x1xf32>
    %c0_55 = arith.constant 0 : index
    %c1 = arith.constant 1 : index
    %58 = vector.load %arg5[%c0_55, %c1] : memref<4x490xf32, #tpu.memory_space<vmem>>, vector<4x352xf32>
    %59 = vector.broadcast %57 : vector<4x1xf32> to vector<4x352xf32>
    %60 = arith.mulf %59, %58 : vector<4x352xf32>
    %61 = arith.addf %56, %60 : vector<4x352xf32>
    %62 = vector.extract_strided_slice %50 {offsets = [0, 2], sizes = [4, 1], strides = [1, 1]} : vector<4x49xf32> to vector<4x1xf32>
    %c0_56 = arith.constant 0 : index
    %c2 = arith.constant 2 : index
    %63 = vector.load %arg5[%c0_56, %c2] : memref<4x490xf32, #tpu.memory_space<vmem>>, vector<4x352xf32>
    %64 = vector.broadcast %62 : vector<4x1xf32> to vector<4x352xf32>
    %65 = arith.mulf %64, %63 : vector<4x352xf32>
    %66 = arith.addf %61, %65 : vector<4x352xf32>
    %67 = vector.extract_strided_slice %50 {offsets = [0, 3], sizes = [4, 1], strides = [1, 1]} : vector<4x49xf32> to vector<4x1xf32>
    %c0_57 = arith.constant 0 : index
    %c3 = arith.constant 3 : index
    %68 = vector.load %arg5[%c0_57, %c3] : memref<4x490xf32, #tpu.memory_space<vmem>>, vector<4x352xf32>
    %69 = vector.broadcast %67 : vector<4x1xf32> to vector<4x352xf32>
    %70 = arith.mulf %69, %68 : vector<4x352xf32>
    %71 = arith.addf %66, %70 : vector<4x352xf32>
    %72 = vector.extract_strided_slice %50 {offsets = [0, 4], sizes = [4, 1], strides = [1, 1]} : vector<4x49xf32> to vector<4x1xf32>
    %c0_58 = arith.constant 0 : index
    %c4 = arith.constant 4 : index
    %73 = vector.load %arg5[%c0_58, %c4] : memref<4x490xf32, #tpu.memory_space<vmem>>, vector<4x352xf32>
    %74 = vector.broadcast %72 : vector<4x1xf32> to vector<4x352xf32>
    %75 = arith.mulf %74, %73 : vector<4x352xf32>
    %76 = arith.addf %71, %75 : vector<4x352xf32>
    %77 = vector.extract_strided_slice %50 {offsets = [0, 5], sizes = [4, 1], strides = [1, 1]} : vector<4x49xf32> to vector<4x1xf32>
    %c0_59 = arith.constant 0 : index
    %c5 = arith.constant 5 : index
    %78 = vector.load %arg5[%c0_59, %c5] : memref<4x490xf32, #tpu.memory_space<vmem>>, vector<4x352xf32>
    %79 = vector.broadcast %77 : vector<4x1xf32> to vector<4x352xf32>
    %80 = arith.mulf %79, %78 : vector<4x352xf32>
    %81 = arith.addf %76, %80 : vector<4x352xf32>
    %82 = vector.extract_strided_slice %50 {offsets = [0, 6], sizes = [4, 1], strides = [1, 1]} : vector<4x49xf32> to vector<4x1xf32>
    %c0_60 = arith.constant 0 : index
    %c6 = arith.constant 6 : index
    %83 = vector.load %arg5[%c0_60, %c6] : memref<4x490xf32, #tpu.memory_space<vmem>>, vector<4x352xf32>
    %84 = vector.broadcast %82 : vector<4x1xf32> to vector<4x352xf32>
    %85 = arith.mulf %84, %83 : vector<4x352xf32>
    %86 = arith.addf %81, %85 : vector<4x352xf32>
    %87 = vector.extract_strided_slice %50 {offsets = [0, 7], sizes = [4, 1], strides = [1, 1]} : vector<4x49xf32> to vector<4x1xf32>
    %c0_61 = arith.constant 0 : index
    %c22 = arith.constant 22 : index
    %88 = vector.load %arg5[%c0_61, %c22] : memref<4x490xf32, #tpu.memory_space<vmem>>, vector<4x352xf32>
    %89 = vector.broadcast %87 : vector<4x1xf32> to vector<4x352xf32>
    %90 = arith.mulf %89, %88 : vector<4x352xf32>
    %91 = arith.addf %86, %90 : vector<4x352xf32>
    %92 = vector.extract_strided_slice %50 {offsets = [0, 8], sizes = [4, 1], strides = [1, 1]} : vector<4x49xf32> to vector<4x1xf32>
    %c0_62 = arith.constant 0 : index
    %c23 = arith.constant 23 : index
    %93 = vector.load %arg5[%c0_62, %c23] : memref<4x490xf32, #tpu.memory_space<vmem>>, vector<4x352xf32>
    %94 = vector.broadcast %92 : vector<4x1xf32> to vector<4x352xf32>
    %95 = arith.mulf %94, %93 : vector<4x352xf32>
    %96 = arith.addf %91, %95 : vector<4x352xf32>
    %97 = vector.extract_strided_slice %50 {offsets = [0, 9], sizes = [4, 1], strides = [1, 1]} : vector<4x49xf32> to vector<4x1xf32>
    %c0_63 = arith.constant 0 : index
    %c24 = arith.constant 24 : index
    %98 = vector.load %arg5[%c0_63, %c24] : memref<4x490xf32, #tpu.memory_space<vmem>>, vector<4x352xf32>
    %99 = vector.broadcast %97 : vector<4x1xf32> to vector<4x352xf32>
    %100 = arith.mulf %99, %98 : vector<4x352xf32>
    %101 = arith.addf %96, %100 : vector<4x352xf32>
    %102 = vector.extract_strided_slice %50 {offsets = [0, 10], sizes = [4, 1], strides = [1, 1]} : vector<4x49xf32> to vector<4x1xf32>
    %c0_64 = arith.constant 0 : index
    %c25 = arith.constant 25 : index
    %103 = vector.load %arg5[%c0_64, %c25] : memref<4x490xf32, #tpu.memory_space<vmem>>, vector<4x352xf32>
    %104 = vector.broadcast %102 : vector<4x1xf32> to vector<4x352xf32>
    %105 = arith.mulf %104, %103 : vector<4x352xf32>
    %106 = arith.addf %101, %105 : vector<4x352xf32>
    %107 = vector.extract_strided_slice %50 {offsets = [0, 11], sizes = [4, 1], strides = [1, 1]} : vector<4x49xf32> to vector<4x1xf32>
    %c0_65 = arith.constant 0 : index
    %c26 = arith.constant 26 : index
    %108 = vector.load %arg5[%c0_65, %c26] : memref<4x490xf32, #tpu.memory_space<vmem>>, vector<4x352xf32>
    %109 = vector.broadcast %107 : vector<4x1xf32> to vector<4x352xf32>
    %110 = arith.mulf %109, %108 : vector<4x352xf32>
    %111 = arith.addf %106, %110 : vector<4x352xf32>
    %112 = vector.extract_strided_slice %50 {offsets = [0, 12], sizes = [4, 1], strides = [1, 1]} : vector<4x49xf32> to vector<4x1xf32>
    %c0_66 = arith.constant 0 : index
    %c27 = arith.constant 27 : index
    %113 = vector.load %arg5[%c0_66, %c27] : memref<4x490xf32, #tpu.memory_space<vmem>>, vector<4x352xf32>
    %114 = vector.broadcast %112 : vector<4x1xf32> to vector<4x352xf32>
    %115 = arith.mulf %114, %113 : vector<4x352xf32>
    %116 = arith.addf %111, %115 : vector<4x352xf32>
    %117 = vector.extract_strided_slice %50 {offsets = [0, 13], sizes = [4, 1], strides = [1, 1]} : vector<4x49xf32> to vector<4x1xf32>
    %c0_67 = arith.constant 0 : index
    %c28 = arith.constant 28 : index
    %118 = vector.load %arg5[%c0_67, %c28] : memref<4x490xf32, #tpu.memory_space<vmem>>, vector<4x352xf32>
    %119 = vector.broadcast %117 : vector<4x1xf32> to vector<4x352xf32>
    %120 = arith.mulf %119, %118 : vector<4x352xf32>
    %121 = arith.addf %116, %120 : vector<4x352xf32>
    %122 = vector.extract_strided_slice %50 {offsets = [0, 14], sizes = [4, 1], strides = [1, 1]} : vector<4x49xf32> to vector<4x1xf32>
    %c0_68 = arith.constant 0 : index
    %c44 = arith.constant 44 : index
    %123 = vector.load %arg5[%c0_68, %c44] : memref<4x490xf32, #tpu.memory_space<vmem>>, vector<4x352xf32>
    %124 = vector.broadcast %122 : vector<4x1xf32> to vector<4x352xf32>
    %125 = arith.mulf %124, %123 : vector<4x352xf32>
    %126 = arith.addf %121, %125 : vector<4x352xf32>
    %127 = vector.extract_strided_slice %50 {offsets = [0, 15], sizes = [4, 1], strides = [1, 1]} : vector<4x49xf32> to vector<4x1xf32>
    %c0_69 = arith.constant 0 : index
    %c45 = arith.constant 45 : index
    %128 = vector.load %arg5[%c0_69, %c45] : memref<4x490xf32, #tpu.memory_space<vmem>>, vector<4x352xf32>
    %129 = vector.broadcast %127 : vector<4x1xf32> to vector<4x352xf32>
    %130 = arith.mulf %129, %128 : vector<4x352xf32>
    %131 = arith.addf %126, %130 : vector<4x352xf32>
    %132 = vector.extract_strided_slice %50 {offsets = [0, 16], sizes = [4, 1], strides = [1, 1]} : vector<4x49xf32> to vector<4x1xf32>
    %c0_70 = arith.constant 0 : index
    %c46 = arith.constant 46 : index
    %133 = vector.load %arg5[%c0_70, %c46] : memref<4x490xf32, #tpu.memory_space<vmem>>, vector<4x352xf32>
    %134 = vector.broadcast %132 : vector<4x1xf32> to vector<4x352xf32>
    %135 = arith.mulf %134, %133 : vector<4x352xf32>
    %136 = arith.addf %131, %135 : vector<4x352xf32>
    %137 = vector.extract_strided_slice %50 {offsets = [0, 17], sizes = [4, 1], strides = [1, 1]} : vector<4x49xf32> to vector<4x1xf32>
    %c0_71 = arith.constant 0 : index
    %c47 = arith.constant 47 : index
    %138 = vector.load %arg5[%c0_71, %c47] : memref<4x490xf32, #tpu.memory_space<vmem>>, vector<4x352xf32>
    %139 = vector.broadcast %137 : vector<4x1xf32> to vector<4x352xf32>
    %140 = arith.mulf %139, %138 : vector<4x352xf32>
    %141 = arith.addf %136, %140 : vector<4x352xf32>
    %142 = vector.extract_strided_slice %50 {offsets = [0, 18], sizes = [4, 1], strides = [1, 1]} : vector<4x49xf32> to vector<4x1xf32>
    %c0_72 = arith.constant 0 : index
    %c48_73 = arith.constant 48 : index
    %143 = vector.load %arg5[%c0_72, %c48_73] : memref<4x490xf32, #tpu.memory_space<vmem>>, vector<4x352xf32>
    %144 = vector.broadcast %142 : vector<4x1xf32> to vector<4x352xf32>
    %145 = arith.mulf %144, %143 : vector<4x352xf32>
    %146 = arith.addf %141, %145 : vector<4x352xf32>
    %147 = vector.extract_strided_slice %50 {offsets = [0, 19], sizes = [4, 1], strides = [1, 1]} : vector<4x49xf32> to vector<4x1xf32>
    %c0_74 = arith.constant 0 : index
    %c49 = arith.constant 49 : index
    %148 = vector.load %arg5[%c0_74, %c49] : memref<4x490xf32, #tpu.memory_space<vmem>>, vector<4x352xf32>
    %149 = vector.broadcast %147 : vector<4x1xf32> to vector<4x352xf32>
    %150 = arith.mulf %149, %148 : vector<4x352xf32>
    %151 = arith.addf %146, %150 : vector<4x352xf32>
    %152 = vector.extract_strided_slice %50 {offsets = [0, 20], sizes = [4, 1], strides = [1, 1]} : vector<4x49xf32> to vector<4x1xf32>
    %c0_75 = arith.constant 0 : index
    %c50 = arith.constant 50 : index
    %153 = vector.load %arg5[%c0_75, %c50] : memref<4x490xf32, #tpu.memory_space<vmem>>, vector<4x352xf32>
    %154 = vector.broadcast %152 : vector<4x1xf32> to vector<4x352xf32>
    %155 = arith.mulf %154, %153 : vector<4x352xf32>
    %156 = arith.addf %151, %155 : vector<4x352xf32>
    %157 = vector.extract_strided_slice %50 {offsets = [0, 21], sizes = [4, 1], strides = [1, 1]} : vector<4x49xf32> to vector<4x1xf32>
    %c0_76 = arith.constant 0 : index
    %c66 = arith.constant 66 : index
    %158 = vector.load %arg5[%c0_76, %c66] : memref<4x490xf32, #tpu.memory_space<vmem>>, vector<4x352xf32>
    %159 = vector.broadcast %157 : vector<4x1xf32> to vector<4x352xf32>
    %160 = arith.mulf %159, %158 : vector<4x352xf32>
    %161 = arith.addf %156, %160 : vector<4x352xf32>
    %162 = vector.extract_strided_slice %50 {offsets = [0, 22], sizes = [4, 1], strides = [1, 1]} : vector<4x49xf32> to vector<4x1xf32>
    %c0_77 = arith.constant 0 : index
    %c67 = arith.constant 67 : index
    %163 = vector.load %arg5[%c0_77, %c67] : memref<4x490xf32, #tpu.memory_space<vmem>>, vector<4x352xf32>
    %164 = vector.broadcast %162 : vector<4x1xf32> to vector<4x352xf32>
    %165 = arith.mulf %164, %163 : vector<4x352xf32>
    %166 = arith.addf %161, %165 : vector<4x352xf32>
    %167 = vector.extract_strided_slice %50 {offsets = [0, 23], sizes = [4, 1], strides = [1, 1]} : vector<4x49xf32> to vector<4x1xf32>
    %c0_78 = arith.constant 0 : index
    %c68 = arith.constant 68 : index
    %168 = vector.load %arg5[%c0_78, %c68] : memref<4x490xf32, #tpu.memory_space<vmem>>, vector<4x352xf32>
    %169 = vector.broadcast %167 : vector<4x1xf32> to vector<4x352xf32>
    %170 = arith.mulf %169, %168 : vector<4x352xf32>
    %171 = arith.addf %166, %170 : vector<4x352xf32>
    %172 = vector.extract_strided_slice %50 {offsets = [0, 24], sizes = [4, 1], strides = [1, 1]} : vector<4x49xf32> to vector<4x1xf32>
    %c0_79 = arith.constant 0 : index
    %c69_80 = arith.constant 69 : index
    %173 = vector.load %arg5[%c0_79, %c69_80] : memref<4x490xf32, #tpu.memory_space<vmem>>, vector<4x352xf32>
    %174 = vector.broadcast %172 : vector<4x1xf32> to vector<4x352xf32>
    %175 = arith.mulf %174, %173 : vector<4x352xf32>
    %176 = arith.addf %171, %175 : vector<4x352xf32>
    %177 = vector.extract_strided_slice %50 {offsets = [0, 25], sizes = [4, 1], strides = [1, 1]} : vector<4x49xf32> to vector<4x1xf32>
    %c0_81 = arith.constant 0 : index
    %c70 = arith.constant 70 : index
    %178 = vector.load %arg5[%c0_81, %c70] : memref<4x490xf32, #tpu.memory_space<vmem>>, vector<4x352xf32>
    %179 = vector.broadcast %177 : vector<4x1xf32> to vector<4x352xf32>
    %180 = arith.mulf %179, %178 : vector<4x352xf32>
    %181 = arith.addf %176, %180 : vector<4x352xf32>
    %182 = vector.extract_strided_slice %50 {offsets = [0, 26], sizes = [4, 1], strides = [1, 1]} : vector<4x49xf32> to vector<4x1xf32>
    %c0_82 = arith.constant 0 : index
    %c71 = arith.constant 71 : index
    %183 = vector.load %arg5[%c0_82, %c71] : memref<4x490xf32, #tpu.memory_space<vmem>>, vector<4x352xf32>
    %184 = vector.broadcast %182 : vector<4x1xf32> to vector<4x352xf32>
    %185 = arith.mulf %184, %183 : vector<4x352xf32>
    %186 = arith.addf %181, %185 : vector<4x352xf32>
    %187 = vector.extract_strided_slice %50 {offsets = [0, 27], sizes = [4, 1], strides = [1, 1]} : vector<4x49xf32> to vector<4x1xf32>
    %c0_83 = arith.constant 0 : index
    %c72 = arith.constant 72 : index
    %188 = vector.load %arg5[%c0_83, %c72] : memref<4x490xf32, #tpu.memory_space<vmem>>, vector<4x352xf32>
    %189 = vector.broadcast %187 : vector<4x1xf32> to vector<4x352xf32>
    %190 = arith.mulf %189, %188 : vector<4x352xf32>
    %191 = arith.addf %186, %190 : vector<4x352xf32>
    %192 = vector.extract_strided_slice %50 {offsets = [0, 28], sizes = [4, 1], strides = [1, 1]} : vector<4x49xf32> to vector<4x1xf32>
    %c0_84 = arith.constant 0 : index
    %c88 = arith.constant 88 : index
    %193 = vector.load %arg5[%c0_84, %c88] : memref<4x490xf32, #tpu.memory_space<vmem>>, vector<4x352xf32>
    %194 = vector.broadcast %192 : vector<4x1xf32> to vector<4x352xf32>
    %195 = arith.mulf %194, %193 : vector<4x352xf32>
    %196 = arith.addf %191, %195 : vector<4x352xf32>
    %197 = vector.extract_strided_slice %50 {offsets = [0, 29], sizes = [4, 1], strides = [1, 1]} : vector<4x49xf32> to vector<4x1xf32>
    %c0_85 = arith.constant 0 : index
    %c89 = arith.constant 89 : index
    %198 = vector.load %arg5[%c0_85, %c89] : memref<4x490xf32, #tpu.memory_space<vmem>>, vector<4x352xf32>
    %199 = vector.broadcast %197 : vector<4x1xf32> to vector<4x352xf32>
    %200 = arith.mulf %199, %198 : vector<4x352xf32>
    %201 = arith.addf %196, %200 : vector<4x352xf32>
    %202 = vector.extract_strided_slice %50 {offsets = [0, 30], sizes = [4, 1], strides = [1, 1]} : vector<4x49xf32> to vector<4x1xf32>
    %c0_86 = arith.constant 0 : index
    %c90 = arith.constant 90 : index
    %203 = vector.load %arg5[%c0_86, %c90] : memref<4x490xf32, #tpu.memory_space<vmem>>, vector<4x352xf32>
    %204 = vector.broadcast %202 : vector<4x1xf32> to vector<4x352xf32>
    %205 = arith.mulf %204, %203 : vector<4x352xf32>
    %206 = arith.addf %201, %205 : vector<4x352xf32>
    %207 = vector.extract_strided_slice %50 {offsets = [0, 31], sizes = [4, 1], strides = [1, 1]} : vector<4x49xf32> to vector<4x1xf32>
    %c0_87 = arith.constant 0 : index
    %c91_88 = arith.constant 91 : index
    %208 = vector.load %arg5[%c0_87, %c91_88] : memref<4x490xf32, #tpu.memory_space<vmem>>, vector<4x352xf32>
    %209 = vector.broadcast %207 : vector<4x1xf32> to vector<4x352xf32>
    %210 = arith.mulf %209, %208 : vector<4x352xf32>
    %211 = arith.addf %206, %210 : vector<4x352xf32>
    %212 = vector.extract_strided_slice %50 {offsets = [0, 32], sizes = [4, 1], strides = [1, 1]} : vector<4x49xf32> to vector<4x1xf32>
    %c0_89 = arith.constant 0 : index
    %c92 = arith.constant 92 : index
    %213 = vector.load %arg5[%c0_89, %c92] : memref<4x490xf32, #tpu.memory_space<vmem>>, vector<4x352xf32>
    %214 = vector.broadcast %212 : vector<4x1xf32> to vector<4x352xf32>
    %215 = arith.mulf %214, %213 : vector<4x352xf32>
    %216 = arith.addf %211, %215 : vector<4x352xf32>
    %217 = vector.extract_strided_slice %50 {offsets = [0, 33], sizes = [4, 1], strides = [1, 1]} : vector<4x49xf32> to vector<4x1xf32>
    %c0_90 = arith.constant 0 : index
    %c93 = arith.constant 93 : index
    %218 = vector.load %arg5[%c0_90, %c93] : memref<4x490xf32, #tpu.memory_space<vmem>>, vector<4x352xf32>
    %219 = vector.broadcast %217 : vector<4x1xf32> to vector<4x352xf32>
    %220 = arith.mulf %219, %218 : vector<4x352xf32>
    %221 = arith.addf %216, %220 : vector<4x352xf32>
    %222 = vector.extract_strided_slice %50 {offsets = [0, 34], sizes = [4, 1], strides = [1, 1]} : vector<4x49xf32> to vector<4x1xf32>
    %c0_91 = arith.constant 0 : index
    %c94 = arith.constant 94 : index
    %223 = vector.load %arg5[%c0_91, %c94] : memref<4x490xf32, #tpu.memory_space<vmem>>, vector<4x352xf32>
    %224 = vector.broadcast %222 : vector<4x1xf32> to vector<4x352xf32>
    %225 = arith.mulf %224, %223 : vector<4x352xf32>
    %226 = arith.addf %221, %225 : vector<4x352xf32>
    %227 = vector.extract_strided_slice %50 {offsets = [0, 35], sizes = [4, 1], strides = [1, 1]} : vector<4x49xf32> to vector<4x1xf32>
    %c0_92 = arith.constant 0 : index
    %c110 = arith.constant 110 : index
    %228 = vector.load %arg5[%c0_92, %c110] : memref<4x490xf32, #tpu.memory_space<vmem>>, vector<4x352xf32>
    %229 = vector.broadcast %227 : vector<4x1xf32> to vector<4x352xf32>
    %230 = arith.mulf %229, %228 : vector<4x352xf32>
    %231 = arith.addf %226, %230 : vector<4x352xf32>
    %232 = vector.extract_strided_slice %50 {offsets = [0, 36], sizes = [4, 1], strides = [1, 1]} : vector<4x49xf32> to vector<4x1xf32>
    %c0_93 = arith.constant 0 : index
    %c111 = arith.constant 111 : index
    %233 = vector.load %arg5[%c0_93, %c111] : memref<4x490xf32, #tpu.memory_space<vmem>>, vector<4x352xf32>
    %234 = vector.broadcast %232 : vector<4x1xf32> to vector<4x352xf32>
    %235 = arith.mulf %234, %233 : vector<4x352xf32>
    %236 = arith.addf %231, %235 : vector<4x352xf32>
    %237 = vector.extract_strided_slice %50 {offsets = [0, 37], sizes = [4, 1], strides = [1, 1]} : vector<4x49xf32> to vector<4x1xf32>
    %c0_94 = arith.constant 0 : index
    %c112_95 = arith.constant 112 : index
    %238 = vector.load %arg5[%c0_94, %c112_95] : memref<4x490xf32, #tpu.memory_space<vmem>>, vector<4x352xf32>
    %239 = vector.broadcast %237 : vector<4x1xf32> to vector<4x352xf32>
    %240 = arith.mulf %239, %238 : vector<4x352xf32>
    %241 = arith.addf %236, %240 : vector<4x352xf32>
    %242 = vector.extract_strided_slice %50 {offsets = [0, 38], sizes = [4, 1], strides = [1, 1]} : vector<4x49xf32> to vector<4x1xf32>
    %c0_96 = arith.constant 0 : index
    %c113_97 = arith.constant 113 : index
    %243 = vector.load %arg5[%c0_96, %c113_97] : memref<4x490xf32, #tpu.memory_space<vmem>>, vector<4x352xf32>
    %244 = vector.broadcast %242 : vector<4x1xf32> to vector<4x352xf32>
    %245 = arith.mulf %244, %243 : vector<4x352xf32>
    %246 = arith.addf %241, %245 : vector<4x352xf32>
    %247 = vector.extract_strided_slice %50 {offsets = [0, 39], sizes = [4, 1], strides = [1, 1]} : vector<4x49xf32> to vector<4x1xf32>
    %c0_98 = arith.constant 0 : index
    %c114 = arith.constant 114 : index
    %248 = vector.load %arg5[%c0_98, %c114] : memref<4x490xf32, #tpu.memory_space<vmem>>, vector<4x352xf32>
    %249 = vector.broadcast %247 : vector<4x1xf32> to vector<4x352xf32>
    %250 = arith.mulf %249, %248 : vector<4x352xf32>
    %251 = arith.addf %246, %250 : vector<4x352xf32>
    %252 = vector.extract_strided_slice %50 {offsets = [0, 40], sizes = [4, 1], strides = [1, 1]} : vector<4x49xf32> to vector<4x1xf32>
    %c0_99 = arith.constant 0 : index
    %c115 = arith.constant 115 : index
    %253 = vector.load %arg5[%c0_99, %c115] : memref<4x490xf32, #tpu.memory_space<vmem>>, vector<4x352xf32>
    %254 = vector.broadcast %252 : vector<4x1xf32> to vector<4x352xf32>
    %255 = arith.mulf %254, %253 : vector<4x352xf32>
    %256 = arith.addf %251, %255 : vector<4x352xf32>
    %257 = vector.extract_strided_slice %50 {offsets = [0, 41], sizes = [4, 1], strides = [1, 1]} : vector<4x49xf32> to vector<4x1xf32>
    %c0_100 = arith.constant 0 : index
    %c116 = arith.constant 116 : index
    %258 = vector.load %arg5[%c0_100, %c116] : memref<4x490xf32, #tpu.memory_space<vmem>>, vector<4x352xf32>
    %259 = vector.broadcast %257 : vector<4x1xf32> to vector<4x352xf32>
    %260 = arith.mulf %259, %258 : vector<4x352xf32>
    %261 = arith.addf %256, %260 : vector<4x352xf32>
    %262 = vector.extract_strided_slice %50 {offsets = [0, 42], sizes = [4, 1], strides = [1, 1]} : vector<4x49xf32> to vector<4x1xf32>
    %c0_101 = arith.constant 0 : index
    %c132 = arith.constant 132 : index
    %263 = vector.load %arg5[%c0_101, %c132] : memref<4x490xf32, #tpu.memory_space<vmem>>, vector<4x352xf32>
    %264 = vector.broadcast %262 : vector<4x1xf32> to vector<4x352xf32>
    %265 = arith.mulf %264, %263 : vector<4x352xf32>
    %266 = arith.addf %261, %265 : vector<4x352xf32>
    %267 = vector.extract_strided_slice %50 {offsets = [0, 43], sizes = [4, 1], strides = [1, 1]} : vector<4x49xf32> to vector<4x1xf32>
    %c0_102 = arith.constant 0 : index
    %c133 = arith.constant 133 : index
    %268 = vector.load %arg5[%c0_102, %c133] : memref<4x490xf32, #tpu.memory_space<vmem>>, vector<4x352xf32>
    %269 = vector.broadcast %267 : vector<4x1xf32> to vector<4x352xf32>
    %270 = arith.mulf %269, %268 : vector<4x352xf32>
    %271 = arith.addf %266, %270 : vector<4x352xf32>
    %272 = vector.extract_strided_slice %50 {offsets = [0, 44], sizes = [4, 1], strides = [1, 1]} : vector<4x49xf32> to vector<4x1xf32>
    %c0_103 = arith.constant 0 : index
    %c134 = arith.constant 134 : index
    %273 = vector.load %arg5[%c0_103, %c134] : memref<4x490xf32, #tpu.memory_space<vmem>>, vector<4x352xf32>
    %274 = vector.broadcast %272 : vector<4x1xf32> to vector<4x352xf32>
    %275 = arith.mulf %274, %273 : vector<4x352xf32>
    %276 = arith.addf %271, %275 : vector<4x352xf32>
    %277 = vector.extract_strided_slice %50 {offsets = [0, 45], sizes = [4, 1], strides = [1, 1]} : vector<4x49xf32> to vector<4x1xf32>
    %c0_104 = arith.constant 0 : index
    %c135_105 = arith.constant 135 : index
    %278 = vector.load %arg5[%c0_104, %c135_105] : memref<4x490xf32, #tpu.memory_space<vmem>>, vector<4x352xf32>
    %279 = vector.broadcast %277 : vector<4x1xf32> to vector<4x352xf32>
    %280 = arith.mulf %279, %278 : vector<4x352xf32>
    %281 = arith.addf %276, %280 : vector<4x352xf32>
    %282 = vector.extract_strided_slice %50 {offsets = [0, 46], sizes = [4, 1], strides = [1, 1]} : vector<4x49xf32> to vector<4x1xf32>
    %c0_106 = arith.constant 0 : index
    %c136 = arith.constant 136 : index
    %283 = vector.load %arg5[%c0_106, %c136] : memref<4x490xf32, #tpu.memory_space<vmem>>, vector<4x352xf32>
    %284 = vector.broadcast %282 : vector<4x1xf32> to vector<4x352xf32>
    %285 = arith.mulf %284, %283 : vector<4x352xf32>
    %286 = arith.addf %281, %285 : vector<4x352xf32>
    %287 = vector.extract_strided_slice %50 {offsets = [0, 47], sizes = [4, 1], strides = [1, 1]} : vector<4x49xf32> to vector<4x1xf32>
    %c0_107 = arith.constant 0 : index
    %c137 = arith.constant 137 : index
    %288 = vector.load %arg5[%c0_107, %c137] : memref<4x490xf32, #tpu.memory_space<vmem>>, vector<4x352xf32>
    %289 = vector.broadcast %287 : vector<4x1xf32> to vector<4x352xf32>
    %290 = arith.mulf %289, %288 : vector<4x352xf32>
    %291 = arith.addf %286, %290 : vector<4x352xf32>
    %292 = vector.extract_strided_slice %50 {offsets = [0, 48], sizes = [4, 1], strides = [1, 1]} : vector<4x49xf32> to vector<4x1xf32>
    %c0_108 = arith.constant 0 : index
    %c138 = arith.constant 138 : index
    %293 = vector.load %arg5[%c0_108, %c138] : memref<4x490xf32, #tpu.memory_space<vmem>>, vector<4x352xf32>
    %294 = vector.broadcast %292 : vector<4x1xf32> to vector<4x352xf32>
    %295 = arith.mulf %294, %293 : vector<4x352xf32>
    %296 = arith.addf %291, %295 : vector<4x352xf32>
    %c0_109 = arith.constant 0 : index
    %c0_110 = arith.constant 0 : index
    %297 = vector.load %arg3[%c0_109, %c0_110] : memref<8x4xf32, #tpu.memory_space<vmem>>, vector<8x4xf32>
    %cst_111 = arith.constant dense<0.000000e+00> : vector<8x352xf32>
    %298 = tpu.matmul %297, %296, %cst_111 {dimension_numbers = #tpu.dot_dimension_numbers<[1], [0], [0], [1], [0, 0, 1, 1], [], []>} : vector<8x4xf32>, vector<4x352xf32>, vector<8x352xf32> -> vector<8x352xf32>
    %299 = vector.extract_strided_slice %298 {offsets = [0, 0], sizes = [8, 16], strides = [1, 1]} : vector<8x352xf32> to vector<8x16xf32>
    %c0_112 = arith.constant 0 : index
    %c0_113 = arith.constant 0 : index
    %c0_114 = arith.constant 0 : index
    %300 = vector.load %arg4[%c0_112, %c0_113, %c0_114] : memref<1x8x256xf32, #tpu.memory_space<vmem>>, vector<1x8x16xf32>
    %301 = vector.shape_cast %300 : vector<1x8x16xf32> to vector<8x16xf32>
    %302 = vector.shape_cast %299 : vector<8x16xf32> to vector<1x8x16xf32>
    tpu.vector_store %arg4[%c0_112, %c0_113, %c0_114], %302 {strides = array<i32>} : memref<1x8x256xf32, #tpu.memory_space<vmem>>, vector<1x8x16xf32>,
    %303 = vector.extract_strided_slice %298 {offsets = [0, 22], sizes = [8, 16], strides = [1, 1]} : vector<8x352xf32> to vector<8x16xf32>
    %c0_115 = arith.constant 0 : index
    %c0_116 = arith.constant 0 : index
    %c16_117 = arith.constant 16 : index
    %304 = vector.load %arg4[%c0_115, %c0_116, %c16_117] : memref<1x8x256xf32, #tpu.memory_space<vmem>>, vector<1x8x16xf32>
    %305 = vector.shape_cast %304 : vector<1x8x16xf32> to vector<8x16xf32>
    %306 = vector.shape_cast %303 : vector<8x16xf32> to vector<1x8x16xf32>
    tpu.vector_store %arg4[%c0_115, %c0_116, %c16_117], %306 {strides = array<i32>} : memref<1x8x256xf32, #tpu.memory_space<vmem>>, vector<1x8x16xf32>,
    %307 = vector.extract_strided_slice %298 {offsets = [0, 44], sizes = [8, 16], strides = [1, 1]} : vector<8x352xf32> to vector<8x16xf32>
    %c0_118 = arith.constant 0 : index
    %c0_119 = arith.constant 0 : index
    %c32_120 = arith.constant 32 : index
    %308 = vector.load %arg4[%c0_118, %c0_119, %c32_120] : memref<1x8x256xf32, #tpu.memory_space<vmem>>, vector<1x8x16xf32>
    %309 = vector.shape_cast %308 : vector<1x8x16xf32> to vector<8x16xf32>
    %310 = vector.shape_cast %307 : vector<8x16xf32> to vector<1x8x16xf32>
    tpu.vector_store %arg4[%c0_118, %c0_119, %c32_120], %310 {strides = array<i32>} : memref<1x8x256xf32, #tpu.memory_space<vmem>>, vector<1x8x16xf32>,
    %311 = vector.extract_strided_slice %298 {offsets = [0, 66], sizes = [8, 16], strides = [1, 1]} : vector<8x352xf32> to vector<8x16xf32>
    %c0_121 = arith.constant 0 : index
    %c0_122 = arith.constant 0 : index
    %c48_123 = arith.constant 48 : index
    %312 = vector.load %arg4[%c0_121, %c0_122, %c48_123] : memref<1x8x256xf32, #tpu.memory_space<vmem>>, vector<1x8x16xf32>
    %313 = vector.shape_cast %312 : vector<1x8x16xf32> to vector<8x16xf32>
    %314 = vector.shape_cast %311 : vector<8x16xf32> to vector<1x8x16xf32>
    tpu.vector_store %arg4[%c0_121, %c0_122, %c48_123], %314 {strides = array<i32>} : memref<1x8x256xf32, #tpu.memory_space<vmem>>, vector<1x8x16xf32>,
    %315 = vector.extract_strided_slice %298 {offsets = [0, 88], sizes = [8, 16], strides = [1, 1]} : vector<8x352xf32> to vector<8x16xf32>
    %c0_124 = arith.constant 0 : index
    %c0_125 = arith.constant 0 : index
    %c64_126 = arith.constant 64 : index
    %316 = vector.load %arg4[%c0_124, %c0_125, %c64_126] : memref<1x8x256xf32, #tpu.memory_space<vmem>>, vector<1x8x16xf32>
    %317 = vector.shape_cast %316 : vector<1x8x16xf32> to vector<8x16xf32>
    %318 = vector.shape_cast %315 : vector<8x16xf32> to vector<1x8x16xf32>
    tpu.vector_store %arg4[%c0_124, %c0_125, %c64_126], %318 {strides = array<i32>} : memref<1x8x256xf32, #tpu.memory_space<vmem>>, vector<1x8x16xf32>,
    %319 = vector.extract_strided_slice %298 {offsets = [0, 110], sizes = [8, 16], strides = [1, 1]} : vector<8x352xf32> to vector<8x16xf32>
    %c0_127 = arith.constant 0 : index
    %c0_128 = arith.constant 0 : index
    %c80_129 = arith.constant 80 : index
    %320 = vector.load %arg4[%c0_127, %c0_128, %c80_129] : memref<1x8x256xf32, #tpu.memory_space<vmem>>, vector<1x8x16xf32>
    %321 = vector.shape_cast %320 : vector<1x8x16xf32> to vector<8x16xf32>
    %322 = vector.shape_cast %319 : vector<8x16xf32> to vector<1x8x16xf32>
    tpu.vector_store %arg4[%c0_127, %c0_128, %c80_129], %322 {strides = array<i32>} : memref<1x8x256xf32, #tpu.memory_space<vmem>>, vector<1x8x16xf32>,
    %323 = vector.extract_strided_slice %298 {offsets = [0, 132], sizes = [8, 16], strides = [1, 1]} : vector<8x352xf32> to vector<8x16xf32>
    %c0_130 = arith.constant 0 : index
    %c0_131 = arith.constant 0 : index
    %c96_132 = arith.constant 96 : index
    %324 = vector.load %arg4[%c0_130, %c0_131, %c96_132] : memref<1x8x256xf32, #tpu.memory_space<vmem>>, vector<1x8x16xf32>
    %325 = vector.shape_cast %324 : vector<1x8x16xf32> to vector<8x16xf32>
    %326 = vector.shape_cast %323 : vector<8x16xf32> to vector<1x8x16xf32>
    tpu.vector_store %arg4[%c0_130, %c0_131, %c96_132], %326 {strides = array<i32>} : memref<1x8x256xf32, #tpu.memory_space<vmem>>, vector<1x8x16xf32>,
    %327 = vector.extract_strided_slice %298 {offsets = [0, 154], sizes = [8, 16], strides = [1, 1]} : vector<8x352xf32> to vector<8x16xf32>
    %c0_133 = arith.constant 0 : index
    %c0_134 = arith.constant 0 : index
    %c112_135 = arith.constant 112 : index
    %328 = vector.load %arg4[%c0_133, %c0_134, %c112_135] : memref<1x8x256xf32, #tpu.memory_space<vmem>>, vector<1x8x16xf32>
    %329 = vector.shape_cast %328 : vector<1x8x16xf32> to vector<8x16xf32>
    %330 = vector.shape_cast %327 : vector<8x16xf32> to vector<1x8x16xf32>
    tpu.vector_store %arg4[%c0_133, %c0_134, %c112_135], %330 {strides = array<i32>} : memref<1x8x256xf32, #tpu.memory_space<vmem>>, vector<1x8x16xf32>,
    %331 = vector.extract_strided_slice %298 {offsets = [0, 176], sizes = [8, 16], strides = [1, 1]} : vector<8x352xf32> to vector<8x16xf32>
    %c0_136 = arith.constant 0 : index
    %c0_137 = arith.constant 0 : index
    %c128_138 = arith.constant 128 : index
    %332 = vector.load %arg4[%c0_136, %c0_137, %c128_138] : memref<1x8x256xf32, #tpu.memory_space<vmem>>, vector<1x8x16xf32>
    %333 = vector.shape_cast %332 : vector<1x8x16xf32> to vector<8x16xf32>
    %334 = vector.shape_cast %331 : vector<8x16xf32> to vector<1x8x16xf32>
    tpu.vector_store %arg4[%c0_136, %c0_137, %c128_138], %334 {strides = array<i32>} : memref<1x8x256xf32, #tpu.memory_space<vmem>>, vector<1x8x16xf32>,
    %335 = vector.extract_strided_slice %298 {offsets = [0, 198], sizes = [8, 16], strides = [1, 1]} : vector<8x352xf32> to vector<8x16xf32>
    %c0_139 = arith.constant 0 : index
    %c0_140 = arith.constant 0 : index
    %c144_141 = arith.constant 144 : index
    %336 = vector.load %arg4[%c0_139, %c0_140, %c144_141] : memref<1x8x256xf32, #tpu.memory_space<vmem>>, vector<1x8x16xf32>
    %337 = vector.shape_cast %336 : vector<1x8x16xf32> to vector<8x16xf32>
    %338 = vector.shape_cast %335 : vector<8x16xf32> to vector<1x8x16xf32>
    tpu.vector_store %arg4[%c0_139, %c0_140, %c144_141], %338 {strides = array<i32>} : memref<1x8x256xf32, #tpu.memory_space<vmem>>, vector<1x8x16xf32>,
    %339 = vector.extract_strided_slice %298 {offsets = [0, 220], sizes = [8, 16], strides = [1, 1]} : vector<8x352xf32> to vector<8x16xf32>
    %c0_142 = arith.constant 0 : index
    %c0_143 = arith.constant 0 : index
    %c160_144 = arith.constant 160 : index
    %340 = vector.load %arg4[%c0_142, %c0_143, %c160_144] : memref<1x8x256xf32, #tpu.memory_space<vmem>>, vector<1x8x16xf32>
    %341 = vector.shape_cast %340 : vector<1x8x16xf32> to vector<8x16xf32>
    %342 = vector.shape_cast %339 : vector<8x16xf32> to vector<1x8x16xf32>
    tpu.vector_store %arg4[%c0_142, %c0_143, %c160_144], %342 {strides = array<i32>} : memref<1x8x256xf32, #tpu.memory_space<vmem>>, vector<1x8x16xf32>,
    %343 = vector.extract_strided_slice %298 {offsets = [0, 242], sizes = [8, 16], strides = [1, 1]} : vector<8x352xf32> to vector<8x16xf32>
    %c0_145 = arith.constant 0 : index
    %c0_146 = arith.constant 0 : index
    %c176_147 = arith.constant 176 : index
    %344 = vector.load %arg4[%c0_145, %c0_146, %c176_147] : memref<1x8x256xf32, #tpu.memory_space<vmem>>, vector<1x8x16xf32>
    %345 = vector.shape_cast %344 : vector<1x8x16xf32> to vector<8x16xf32>
    %346 = vector.shape_cast %343 : vector<8x16xf32> to vector<1x8x16xf32>
    tpu.vector_store %arg4[%c0_145, %c0_146, %c176_147], %346 {strides = array<i32>} : memref<1x8x256xf32, #tpu.memory_space<vmem>>, vector<1x8x16xf32>,
    %347 = vector.extract_strided_slice %298 {offsets = [0, 264], sizes = [8, 16], strides = [1, 1]} : vector<8x352xf32> to vector<8x16xf32>
    %c0_148 = arith.constant 0 : index
    %c0_149 = arith.constant 0 : index
    %c192_150 = arith.constant 192 : index
    %348 = vector.load %arg4[%c0_148, %c0_149, %c192_150] : memref<1x8x256xf32, #tpu.memory_space<vmem>>, vector<1x8x16xf32>
    %349 = vector.shape_cast %348 : vector<1x8x16xf32> to vector<8x16xf32>
    %350 = vector.shape_cast %347 : vector<8x16xf32> to vector<1x8x16xf32>
    tpu.vector_store %arg4[%c0_148, %c0_149, %c192_150], %350 {strides = array<i32>} : memref<1x8x256xf32, #tpu.memory_space<vmem>>, vector<1x8x16xf32>,
    %351 = vector.extract_strided_slice %298 {offsets = [0, 286], sizes = [8, 16], strides = [1, 1]} : vector<8x352xf32> to vector<8x16xf32>
    %c0_151 = arith.constant 0 : index
    %c0_152 = arith.constant 0 : index
    %c208_153 = arith.constant 208 : index
    %352 = vector.load %arg4[%c0_151, %c0_152, %c208_153] : memref<1x8x256xf32, #tpu.memory_space<vmem>>, vector<1x8x16xf32>
    %353 = vector.shape_cast %352 : vector<1x8x16xf32> to vector<8x16xf32>
    %354 = vector.shape_cast %351 : vector<8x16xf32> to vector<1x8x16xf32>
    tpu.vector_store %arg4[%c0_151, %c0_152, %c208_153], %354 {strides = array<i32>} : memref<1x8x256xf32, #tpu.memory_space<vmem>>, vector<1x8x16xf32>,
    %355 = vector.extract_strided_slice %298 {offsets = [0, 308], sizes = [8, 16], strides = [1, 1]} : vector<8x352xf32> to vector<8x16xf32>
    %c0_154 = arith.constant 0 : index
    %c0_155 = arith.constant 0 : index
    %c224_156 = arith.constant 224 : index
    %356 = vector.load %arg4[%c0_154, %c0_155, %c224_156] : memref<1x8x256xf32, #tpu.memory_space<vmem>>, vector<1x8x16xf32>
    %357 = vector.shape_cast %356 : vector<1x8x16xf32> to vector<8x16xf32>
    %358 = vector.shape_cast %355 : vector<8x16xf32> to vector<1x8x16xf32>
    tpu.vector_store %arg4[%c0_154, %c0_155, %c224_156], %358 {strides = array<i32>} : memref<1x8x256xf32, #tpu.memory_space<vmem>>, vector<1x8x16xf32>,
    %359 = vector.extract_strided_slice %298 {offsets = [0, 330], sizes = [8, 16], strides = [1, 1]} : vector<8x352xf32> to vector<8x16xf32>
    %c0_157 = arith.constant 0 : index
    %c0_158 = arith.constant 0 : index
    %c240_159 = arith.constant 240 : index
    %360 = vector.load %arg4[%c0_157, %c0_158, %c240_159] : memref<1x8x256xf32, #tpu.memory_space<vmem>>, vector<1x8x16xf32>
    %361 = vector.shape_cast %360 : vector<1x8x16xf32> to vector<8x16xf32>
    %362 = vector.shape_cast %359 : vector<8x16xf32> to vector<1x8x16xf32>
    tpu.vector_store %arg4[%c0_157, %c0_158, %c240_159], %362 {strides = array<i32>} : memref<1x8x256xf32, #tpu.memory_space<vmem>>, vector<1x8x16xf32>,
    return
  }
  func.func @transform_0(%arg0: i32) -> (i32, i32, i32) {
    %c0_i32 = arith.constant 0 : i32
    %c0_i32_0 = arith.constant 0 : i32
    %c0_i32_1 = arith.constant 0 : i32
    return %arg0, %c0_i32, %c0_i32_0 : i32, i32, i32
  }
  func.func @transform_1(%arg0: i32) -> (i32, i32) {
    %c0_i32 = arith.constant 0 : i32
    %c0_i32_0 = arith.constant 0 : i32
    %c0_i32_1 = arith.constant 0 : i32
    return %c0_i32, %c0_i32_0 : i32, i32
  }
  func.func @transform_2(%arg0: i32) -> (i32, i32) {
    %c0_i32 = arith.constant 0 : i32
    %c0_i32_0 = arith.constant 0 : i32
    %c0_i32_1 = arith.constant 0 : i32
    return %c0_i32, %c0_i32_0 : i32, i32
  }
  func.func @transform_3(%arg0: i32) -> (i32, i32, i32) {
    %c0_i32 = arith.constant 0 : i32
    %c0_i32_0 = arith.constant 0 : i32
    %c0_i32_1 = arith.constant 0 : i32
    return %arg0, %c0_i32, %c0_i32_0 : i32, i32, i32
  }
}

</mosaic_0001>

<llo_original>
// kernel: tpu_custom_call.1
$region0: #{tpu_custom_call.1}
  #allocation0 [shape = 'u32[]', space=smem, size = 0x4, offset = 0x4, fixed_abs, tag = 'smem constant byte address 0x4 - core index']
  #allocation1 [shape = 'u32[144,128]{1,0:T(1,128)}', space=vmem, size = 0x12000, scoped, tag = 'internal scratch']
  #allocation2 [shape = 'f32[4,490]{1,0:T(4,128)}', space=vmem, size = 0x2000, scoped, tag = 'scratch operand']
  %s0 = inlined_call_operand.hbm [shape: f32[2,4,256], index: 0, kind: input, shape index: {}]
  %s1 = inlined_call_operand.vmem [shape: f32[4,49], index: 1, kind: input, shape index: {}]
  %s2 = inlined_call_operand.vmem [shape: f32[8,4], index: 2, kind: input, shape index: {}]
  %s3 = inlined_call_operand.hbm [shape: f32[2,8,256], index: 3, kind: output, shape index: {}]
  %s4 = sld [smem:[#allocation0]]
  $region49: #{tpu_custom_call.1} parent=0
    _
  %s6 = ssub.s32 1, %s4
  %s7 = scalar_select 0, %s6, %s4
  $region1: #{tpu_custom_call.1} parent=0
    #allocation3 [shape = 'u8[8192]{0}', space=vmem, size = 0x2000, scoped, tag = 'input window, operand 0']
    #allocation4 [shape = 's32[2]{0}', space=sflag, size = 0x8, scoped, tag = 'scoped memory for tpu_custom_call.1']
    #allocation5 [shape = 's32[2]{0}', space=sflag, size = 0x8, scoped, tag = 'scoped memory for tpu_custom_call.1']
    #allocation6 [shape = 'u8[16384]{0}', space=vmem, size = 0x4000, scoped, tag = 'output window, operand 0']
    %8 = vsyncpa [#allocation4], 0
    %s9 = scalar_lea.sflag [#allocation4], 1
    %10 = vsyncpa %s9, 0
    %11 = vsyncpa [#allocation5], 0
    %s12 = scalar_lea.sflag [#allocation5], 1
    %13 = vsyncpa %s12, 0
    loop: start=0, step=1, limit=4
    $region2: #{tpu_custom_call.1} parent=1 // loop_pre_header
      _
    $region3: #{tpu_custom_call.1} parent=1 // loop_header
      %s15 = sphi 0, %s19
      %p16 = scmp.ge.s32.totalorder %s15, 4
      %s25 = sphi 0, %s27
      %s28 = sphi 0, %s25
      %s29 = sphi 0, %s28
      %s45 = sphi 0, %s29
      %s49 = sphi 0, %s49
      %s51 = sphi 0, %s49
      %s52 = sphi 0, %s51
      %s66 = sphi 0, %s52
      %s70 = sphi 0, %s70
      %s72 = sphi 0, %s70
      %s73 = sphi 0, %s72
      %s87 = sphi 0, %s73
      %s93 = sphi 0, %s95
      %s96 = sphi 0, %s93
      %s97 = sphi 0, %s96
      %s113 = sphi 0, %s97
    $region4: #{tpu_custom_call.1} parent=1 // loop_header_branch
      %18 = sbr.rel (%p16) target = $region8
    $region5: #{tpu_custom_call.1} parent=1 // loop_body
      %s20 = ssub.s32 %s15, 1
      %s21 = ssub.s32 %s15, 2
      %s22 = sadd.s32 %s15, 1
      %s23 = ssub.s32 %s15, %s22
      %p24 = scmp.eq.s32.totalorder %s23, 0
      %s26 = sadd.s32 %s25, 1
      %s27 = scalar_select %p24, %s25, %s26
      %p30 = pneg %p24
      %p31 = scmp.eq.s32.totalorder %s15, 1
      %p32 = por %p30, %p31
      %p33 = scmp.ne.s32.totalorder %s25, %s28
      %p34 = scmp.eq.s32.totalorder %s15, 0
      %p35 = por %p33, %p34
      %p36 = scmp.ne.s32.totalorder %s25, %s28
      %p37 = scmp.eq.s32.totalorder %s20, 1
      %p38 = por %p36, %p37
      %p39 = scmp.ne.s32.totalorder %s28, %s29
      %p40 = scmp.eq.s32.totalorder %s20, 0
      %p41 = por %p39, %p40
      %p42 = scmp.ne.s32.totalorder %s28, %s29
      %p43 = scmp.eq.s32.totalorder %s21, 1
      %p44 = por %p42, %p43
      %p46 = scmp.ne.s32.totalorder %s29, %s45
      %p47 = scmp.eq.s32.totalorder %s21, 0
      %p48 = por %p46, %p47
      %s50 = sadd.s32 %s49, 1
      %p53 = scmp.eq.s32.totalorder %s15, 1
      %p54 = scmp.ne.s32.totalorder %s49, %s51
      %p55 = scmp.eq.s32.totalorder %s15, 0
      %p56 = por %p54, %p55
      %p57 = scmp.ne.s32.totalorder %s49, %s51
      %p58 = scmp.eq.s32.totalorder %s20, 1
      %p59 = por %p57, %p58
      %p60 = scmp.ne.s32.totalorder %s51, %s52
      %p61 = scmp.eq.s32.totalorder %s20, 0
      %p62 = por %p60, %p61
      %p63 = scmp.ne.s32.totalorder %s51, %s52
      %p64 = scmp.eq.s32.totalorder %s21, 1
      %p65 = por %p63, %p64
      %p67 = scmp.ne.s32.totalorder %s52, %s66
      %p68 = scmp.eq.s32.totalorder %s21, 0
      %p69 = por %p67, %p68
      %s71 = sadd.s32 %s70, 1
      %p74 = scmp.eq.s32.totalorder %s15, 1
      %p75 = scmp.ne.s32.totalorder %s70, %s72
      %p76 = scmp.eq.s32.totalorder %s15, 0
      %p77 = por %p75, %p76
      %p78 = scmp.ne.s32.totalorder %s70, %s72
      %p79 = scmp.eq.s32.totalorder %s20, 1
      %p80 = por %p78, %p79
      %p81 = scmp.ne.s32.totalorder %s72, %s73
      %p82 = scmp.eq.s32.totalorder %s20, 0
      %p83 = por %p81, %p82
      %p84 = scmp.ne.s32.totalorder %s72, %s73
      %p85 = scmp.eq.s32.totalorder %s21, 1
      %p86 = por %p84, %p85
      %p88 = scmp.ne.s32.totalorder %s73, %s87
      %p89 = scmp.eq.s32.totalorder %s21, 0
      %p90 = por %p88, %p89
      %s91 = ssub.s32 %s15, %s22
      %p92 = scmp.eq.s32.totalorder %s91, 0
      %s94 = sadd.s32 %s93, 1
      %s95 = scalar_select %p92, %s93, %s94
      %p98 = pneg %p92
      %p99 = scmp.eq.s32.totalorder %s15, 1
      %p100 = por %p98, %p99
      %p101 = scmp.ne.s32.totalorder %s93, %s96
      %p102 = scmp.eq.s32.totalorder %s15, 0
      %p103 = por %p101, %p102
      %p104 = scmp.ne.s32.totalorder %s93, %s96
      %p105 = scmp.eq.s32.totalorder %s20, 1
      %p106 = por %p104, %p105
      %p107 = scmp.ne.s32.totalorder %s96, %s97
      %p108 = scmp.eq.s32.totalorder %s20, 0
      %p109 = por %p107, %p108
      %p110 = scmp.ne.s32.totalorder %s96, %s97
      %p111 = scmp.eq.s32.totalorder %s21, 1
      %p112 = por %p110, %p111
      %p114 = scmp.ne.s32.totalorder %s97, %s113
      %p115 = scmp.eq.s32.totalorder %s21, 0
      %p116 = por %p114, %p115
      %p117 = scmp.le.s32.totalorder 1, %s15
      %p118 = scmp.lt.s32.totalorder %s15, 3
      %p119 = pnand %p117, %p118
      %p120 = pneg %p119
      // Predicated region
      $region9: #{tpu_custom_call.1} parent=5 // pred_check
        _
      $region10: #{tpu_custom_call.1} parent=5 // pred_check_branch
        %122 = sbr.rel (%p119) target = $region12
      $region11: #{tpu_custom_call.1} parent=5 // pred_region
        %s123 = ssub.s32 %s15, 1
        // Predicated region
        $region13: #{tpu_custom_call.1} parent=11 // pred_check
          %p124 = pneg %p62
        $region14: #{tpu_custom_call.1} parent=11 // pred_check_branch
          %126 = sbr.rel (%p124) target = $region16
        $region15: #{tpu_custom_call.1} parent=11 // pred_region
          _
        $region16: #{tpu_custom_call.1} parent=11 // pred_fallthru
          _
        // Predicated region
        $region17: #{tpu_custom_call.1} parent=11 // pred_check
          %p127 = pneg %p83
        $region18: #{tpu_custom_call.1} parent=11 // pred_check_branch
          %129 = sbr.rel (%p127) target = $region20
        $region19: #{tpu_custom_call.1} parent=11 // pred_region
          _
        $region20: #{tpu_custom_call.1} parent=11 // pred_fallthru
          _
      $region12: #{tpu_custom_call.1} parent=5 // pred_fallthru
        _
      %p130 = scmp.lt.s32.totalorder %s15, 2
      // Predicated region
      $region21: #{tpu_custom_call.1} parent=5 // pred_check
        %p131 = pneg %p130
      $region22: #{tpu_custom_call.1} parent=5 // pred_check_branch
        %133 = sbr.rel (%p131) target = $region24
      $region23: #{tpu_custom_call.1} parent=5 // pred_region
        // Predicated region
        $region25: #{tpu_custom_call.1} parent=23 // pred_check
          %p134 = pneg %p35
        $region26: #{tpu_custom_call.1} parent=23 // pred_check_branch
          %136 = sbr.rel (%p134) target = $region28
        $region27: #{tpu_custom_call.1} parent=23 // pred_region
          %s137 = sand.u32 %s25, 1
          %s138 = scalar_lea.sflag [#allocation4], %s137
          %s139 = sand.u32 %s25, 1
          %s140 = smul.addr %s139, 8
          %s141 = scalar_lea.vmem [#allocation3], %s140
          %s143 = ssub.s32 128, 128
          %144 = vsyncadd %s138, %s143
          %s145 = smul.addr %s15, 2
          %s146 = smul.addr %s145, 64
          %s147 = scalar_lea.hbm %s0, %s146
          %s149 = sshll.u32 %s141, 4
          %s150 = int_to_ptr.vmem [resolvable:$true] %s149
          %152 = dma.hbm_to_vmem [thread:$0]  %s147, 128, %s150, %s138
        $region28: #{tpu_custom_call.1} parent=23 // pred_fallthru
          _
      $region24: #{tpu_custom_call.1} parent=5 // pred_fallthru
        _
      %p153 = scmp.le.s32.totalorder 1, %s15
      %p154 = scmp.lt.s32.totalorder %s15, 3
      %p155 = pnand %p153, %p154
      %p156 = pneg %p155
      // Predicated region
      $region29: #{tpu_custom_call.1} parent=5 // pred_check
        _
      $region30: #{tpu_custom_call.1} parent=5 // pred_check_branch
        %158 = sbr.rel (%p155) target = $region32
      $region31: #{tpu_custom_call.1} parent=5 // pred_region
        %s159 = ssub.s32 %s15, 1
        %s160 = sand.u32 %s28, 1
        %s161 = scalar_lea.sflag [#allocation4], %s160
        %s162 = sand.u32 %s28, 1
        %s163 = smul.addr %s162, 8
        %s164 = scalar_lea.vmem [#allocation3], %s163
        // Predicated region
        $region33: #{tpu_custom_call.1} parent=31 // pred_check
          %p165 = pneg %p41
        $region34: #{tpu_custom_call.1} parent=31 // pred_check_branch
          %167 = sbr.rel (%p165) target = $region36
        $region35: #{tpu_custom_call.1} parent=31 // pred_region
          %168 = dma.done %s161, 128
        $region36: #{tpu_custom_call.1} parent=31 // pred_fallthru
          _
        %s169 = sand.u32 %s28, 1
        %s170 = scalar_lea.sflag [#allocation4], %s169
        %s171 = sand.u32 %s28, 1
        %s172 = smul.addr %s171, 8
        %s173 = scalar_lea.vmem [#allocation3], %s172
        %p174 = pneg %p41
        %p175 = pneg %p38
        %p176 = pneg %p62
        %p177 = pneg %p59
        %p178 = pneg %p83
        %p179 = pneg %p80
        %p180 = pneg %p109
        %p181 = pneg %p106
        %s182 = sand.u32 %s96, 1
        %s183 = scalar_lea.sflag [#allocation5], %s182
        %s184 = sand.u32 %s96, 1
        %s185 = smul.addr %s184, 16
        %s186 = scalar_lea.vmem [#allocation6], %s185
        %187 = vst [vmem:[#allocation2] sm:$0xff] 0.0
        %vm188 = vcmask 1043456
        %vm189 = vcmask 867332
        %vm190 = vmor %vm189, %vm188
        %191 = vst.msk [vmem:[#allocation2 + $0x8] sm:$0xff] %vm190, 0.0
        %v192 = vld [vmem:[%s164] sm:$0xf]
        %194 = vrot.lane.b32.xlu0 %v192, 69
        %v195 = vpop.permute.xlu0 %194
        %vm197 = vcmask 691752
        %198 = vst.msk [vmem:[#allocation2] sm:$0xf] %vm197, %v195
        %v199 = vld [vmem:[%s164] sm:$0xf]
        %201 = vrot.lane.b32.xlu0 %v199, 75
        %v202 = vpop.permute.xlu0 %201
        %vm204 = vcmask 872152
        %205 = vst.msk [vmem:[#allocation2] sm:$0xf] %vm204, %v202
        %v206 = vld [vmem:[%s164] sm:$0xf]
        %208 = vrot.lane.b32.xlu0 %v206, 81
        %v209 = vpop.permute.xlu0 %208
        %v210 = vrot.slane %v209, 4
        %vm211 = vcmask 662528
        %v212 = vsel %vm211, %v210, %v209
        %vm214 = vcmask 1044360
        %vm215 = vcmask 7172
        %vm216 = vmor %vm215, %vm214
        %217 = vst.msk [vmem:[#allocation2] sm:$0xff] %vm216, %v212
        %v218 = vld [vmem:[%s164] sm:$0xf]
        %220 = vrot.lane.b32.xlu0 %v218, 87
        %v221 = vpop.permute.xlu0 %220
        %vm223 = vcmask 183352
        %224 = vst.msk [vmem:[#allocation2 + $0x4] sm:$0xf] %vm223, %v221
        %v225 = vld [vmem:[%s164] sm:$0xf]
        %227 = vrot.lane.b32.xlu0 %v225, 93
        %v228 = vpop.permute.xlu0 %227
        %vm230 = vcmask 363752
        %231 = vst.msk [vmem:[#allocation2 + $0x4] sm:$0xf] %vm230, %v228
        %v232 = vld [vmem:[%s164] sm:$0xf]
        %234 = vrot.lane.b32.xlu0 %v232, 99
        %v235 = vpop.permute.xlu0 %234
        %vm237 = vcmask 544152
        %238 = vst.msk [vmem:[#allocation2 + $0x4] sm:$0xf] %vm237, %v235
        %v239 = vld [vmem:[%s164] sm:$0xf]
        %241 = vrot.lane.b32.xlu0 %v239, 105
        %v242 = vpop.permute.xlu0 %241
        %vm244 = vcmask 724552
        %245 = vst.msk [vmem:[#allocation2 + $0x4] sm:$0xf] %vm244, %v242
        %v246 = vld [vmem:[%s164] sm:$0xf]
        %248 = vrot.lane.b32.xlu0 %v246, 111
        %v249 = vpop.permute.xlu0 %248
        %vm251 = vcmask 904952
        %252 = vst.msk [vmem:[#allocation2 + $0x4] sm:$0xf] %vm251, %v249
        %v253 = vld [vmem:[%s164 + $0x4] sm:$0xf]
        %255 = vrot.lane.b32.xlu0 %v253, 117
        %v256 = vpop.permute.xlu0 %255
        %v257 = vrot.slane %v256, 4
        %vm258 = vcmask 957440
        %v259 = vsel %vm258, %v257, %v256
        %vm261 = vcmask 1044392
        %vm262 = vcmask 39940
        %vm263 = vmor %vm262, %vm261
        %264 = vst.msk [vmem:[#allocation2 + $0x4] sm:$0xff] %vm263, %v259
        %v265 = vld [vmem:[%s164 + $0x4] sm:$0xf]
        %267 = vrot.lane.b32.xlu0 %v265, 123
        %v268 = vpop.permute.xlu0 %267
        %vm270 = vcmask 216152
        %271 = vst.msk [vmem:[#allocation2 + $0x8] sm:$0xf] %vm270, %v268
        %v272 = vld [vmem:[%s164 + $0x4] sm:$0xf]
        %274 = vrot.lane.b32.xlu0 %v272, 1
        %v275 = vpop.permute.xlu0 %274
        %vm277 = vcmask 396552
        %278 = vst.msk [vmem:[#allocation2 + $0x8] sm:$0xf] %vm277, %v275
        %v279 = vld [vmem:[%s164 + $0x4] sm:$0xf]
        %281 = vrot.lane.b32.xlu0 %v279, 7
        %v282 = vpop.permute.xlu0 %281
        %vm284 = vcmask 576952
        %285 = vst.msk [vmem:[#allocation2 + $0x8] sm:$0xf] %vm284, %v282
        %v286 = vld [vmem:[%s164 + $0x4] sm:$0xf]
        %288 = vrot.lane.b32.xlu0 %v286, 13
        %v289 = vpop.permute.xlu0 %288
        %vm291 = vcmask 757352
        %292 = vst.msk [vmem:[#allocation2 + $0x8] sm:$0xf] %vm291, %v289
        %v293 = vld [vmem:[%s164 + $0x4] sm:$0xf]
        %295 = vrot.lane.b32.xlu0 %v293, 19
        %v296 = vpop.permute.xlu0 %295
        %vm298 = vcmask 937752
        %299 = vst.msk [vmem:[#allocation2 + $0x8] sm:$0xf] %vm298, %v296
        %v300 = vld [vmem:[%s164 + $0x4] sm:$0xf]
        %302 = vrot.lane.b32.xlu0 %v300, 25
        %v303 = vpop.permute.xlu0 %302
        %v304 = vrot.slane %v303, 4
        %vm305 = vcmask 203776
        %v306 = vsel %vm305, %v304, %v303
        %vm308 = vcmask 1044424
        %vm309 = vcmask 72708
        %vm310 = vmor %vm309, %vm308
        %311 = vst.msk [vmem:[#allocation2 + $0x8] sm:$0xff] %vm310, %v306
        %v312 = vld [vmem:[%s164 + $0x4] sm:$0xf]
        %314 = vrot.lane.b32.xlu0 %v312, 31
        %v315 = vpop.permute.xlu0 %314
        %vm317 = vcmask 248952
        %318 = vst.msk [vmem:[#allocation2 + $0xc] sm:$0xf] %vm317, %v315
        %v319 = vld [vmem:[%s1] sm:$0xf]
        %v320 = vld [vmem:[#allocation2] sm:$0xff]
        %v321 = vld [vmem:[#allocation2 + $0x8] sm:$0xf]
        %323 = vset.pattern.permute.xlu0 0
        %324 = vperm.xlu0 %323, %v319
        %v325 = vpop.permute.xlu0 %324
        %v328 = vcombine.high %v320, %v320
        %v330 = vmul.f32 %v325, %v320
        %v331 = vmul.f32 %v325, %v328
        %v332 = vmul.f32 %v325, %v321
        %v333 = vadd.f32 %v330, 0.0
        %v334 = vadd.f32 %v331, 0.0
        %v335 = vadd.f32 %v332, 0.0
        %v336 = vld [vmem:[#allocation2] sm:$0xff]
        %v337 = vld [vmem:[#allocation2 + $0x8] sm:$0xf]
        %338 = vset.pattern.permute.xlu0 1
        %339 = vperm.xlu0 %338, %v319
        %v340 = vpop.permute.xlu0 %339
        %v344 = vcombine.high %v336, %v336
        %345 = vrot.lane.b32.xlu0 %v336, 127
        %v346 = vpop.permute.xlu0 %345
        %347 = vrot.lane.b32.xlu0 %v344, 127
        %v348 = vpop.permute.xlu0 %347
        %349 = vrot.lane.b32.xlu0 %v337, 127
        %v350 = vpop.permute.xlu0 %349
        %vm351 = vcmask 1039360
        %v352 = vsel %vm351, %v346, %v348
        %v353 = vsel %vm351, %v348, %v350
        %v357 = vmul.f32 %v340, %v352
        %v358 = vmul.f32 %v340, %v353
        %v359 = vmul.f32 %v340, %v350
        %v360 = vadd.f32 %v333, %v357
        %v361 = vadd.f32 %v334, %v358
        %v362 = vadd.f32 %v335, %v359
        %v363 = vld [vmem:[#allocation2] sm:$0xff]
        %v364 = vld [vmem:[#allocation2 + $0x8] sm:$0xf]
        %365 = vset.pattern.permute.xlu0 2
        %366 = vperm.xlu0 %365, %v319
        %v367 = vpop.permute.xlu0 %366
        %v371 = vcombine.high %v363, %v363
        %372 = vrot.lane.b32.xlu0 %v363, 126
        %v373 = vpop.permute.xlu0 %372
        %374 = vrot.lane.b32.xlu0 %v371, 126
        %v375 = vpop.permute.xlu0 %374
        %376 = vrot.lane.b32.xlu0 %v364, 126
        %v377 = vpop.permute.xlu0 %376
        %vm378 = vcmask 1031168
        %v379 = vsel %vm378, %v373, %v375
        %v380 = vsel %vm378, %v375, %v377
        %v384 = vmul.f32 %v367, %v379
        %v385 = vmul.f32 %v367, %v380
        %v386 = vmul.f32 %v367, %v377
        %v387 = vadd.f32 %v360, %v384
        %v388 = vadd.f32 %v361, %v385
        %v389 = vadd.f32 %v362, %v386
        %v390 = vld [vmem:[#allocation2] sm:$0xff]
        %v391 = vld [vmem:[#allocation2 + $0x8] sm:$0xf]
        %392 = vset.pattern.permute.xlu0 3
        %393 = vperm.xlu0 %392, %v319
        %v394 = vpop.permute.xlu0 %393
        %v398 = vcombine.high %v390, %v390
        %399 = vrot.lane.b32.xlu0 %v390, 125
        %v400 = vpop.permute.xlu0 %399
        %401 = vrot.lane.b32.xlu0 %v398, 125
        %v402 = vpop.permute.xlu0 %401
        %403 = vrot.lane.b32.xlu0 %v391, 125
        %v404 = vpop.permute.xlu0 %403
        %vm405 = vcmask 1022976
        %v406 = vsel %vm405, %v400, %v402
        %v407 = vsel %vm405, %v402, %v404
        %v411 = vmul.f32 %v394, %v406
        %v412 = vmul.f32 %v394, %v407
        %v413 = vmul.f32 %v394, %v404
        %v414 = vadd.f32 %v387, %v411
        %v415 = vadd.f32 %v388, %v412
        %v416 = vadd.f32 %v389, %v413
        %v417 = vld [vmem:[#allocation2] sm:$0xff]
        %v418 = vld [vmem:[#allocation2 + $0x8] sm:$0xf]
        %419 = vset.pattern.permute.xlu0 4
        %420 = vperm.xlu0 %419, %v319
        %v421 = vpop.permute.xlu0 %420
        %v425 = vcombine.high %v417, %v417
        %426 = vrot.lane.b32.xlu0 %v417, 124
        %v427 = vpop.permute.xlu0 %426
        %428 = vrot.lane.b32.xlu0 %v425, 124
        %v429 = vpop.permute.xlu0 %428
        %430 = vrot.lane.b32.xlu0 %v418, 124
        %v431 = vpop.permute.xlu0 %430
        %vm432 = vcmask 1014784
        %v433 = vsel %vm432, %v427, %v429
        %v434 = vsel %vm432, %v429, %v431
        %v438 = vmul.f32 %v421, %v433
        %v439 = vmul.f32 %v421, %v434
        %v440 = vmul.f32 %v421, %v431
        %v441 = vadd.f32 %v414, %v438
        %v442 = vadd.f32 %v415, %v439
        %v443 = vadd.f32 %v416, %v440
        %v444 = vld [vmem:[#allocation2] sm:$0xff]
        %v445 = vld [vmem:[#allocation2 + $0x8] sm:$0xf]
        %446 = vset.pattern.permute.xlu0 5
        %447 = vperm.xlu0 %446, %v319
        %v448 = vpop.permute.xlu0 %447
        %v452 = vcombine.high %v444, %v444
        %453 = vrot.lane.b32.xlu0 %v444, 123
        %v454 = vpop.permute.xlu0 %453
        %455 = vrot.lane.b32.xlu0 %v452, 123
        %v456 = vpop.permute.xlu0 %455
        %457 = vrot.lane.b32.xlu0 %v445, 123
        %v458 = vpop.permute.xlu0 %457
        %vm459 = vcmask 1006592
        %v460 = vsel %vm459, %v454, %v456
        %v461 = vsel %vm459, %v456, %v458
        %v465 = vmul.f32 %v448, %v460
        %v466 = vmul.f32 %v448, %v461
        %v467 = vmul.f32 %v448, %v458
        %v468 = vadd.f32 %v441, %v465
        %v469 = vadd.f32 %v442, %v466
        %v470 = vadd.f32 %v443, %v467
        %v471 = vld [vmem:[#allocation2] sm:$0xff]
        %v472 = vld [vmem:[#allocation2 + $0x8] sm:$0xf]
        %473 = vset.pattern.permute.xlu0 6
        %474 = vperm.xlu0 %473, %v319
        %v475 = vpop.permute.xlu0 %474
        %v479 = vcombine.high %v471, %v471
        %480 = vrot.lane.b32.xlu0 %v471, 122
        %v481 = vpop.permute.xlu0 %480
        %482 = vrot.lane.b32.xlu0 %v479, 122
        %v483 = vpop.permute.xlu0 %482
        %484 = vrot.lane.b32.xlu0 %v472, 122
        %v485 = vpop.permute.xlu0 %484
        %vm486 = vcmask 998400
        %v487 = vsel %vm486, %v481, %v483
        %v488 = vsel %vm486, %v483, %v485
        %v492 = vmul.f32 %v475, %v487
        %v493 = vmul.f32 %v475, %v488
        %v494 = vmul.f32 %v475, %v485
        %v495 = vadd.f32 %v468, %v492
        %v496 = vadd.f32 %v469, %v493
        %v497 = vadd.f32 %v470, %v494
        %v498 = vld [vmem:[#allocation2] sm:$0xff]
        %v499 = vld [vmem:[#allocation2 + $0x8] sm:$0xf]
        %500 = vset.pattern.permute.xlu0 7
        %501 = vperm.xlu0 %500, %v319
        %v502 = vpop.permute.xlu0 %501
        %v506 = vcombine.high %v498, %v498
        %507 = vrot.lane.b32.xlu0 %v498, 106
        %v508 = vpop.permute.xlu0 %507
        %509 = vrot.lane.b32.xlu0 %v506, 106
        %v510 = vpop.permute.xlu0 %509
        %511 = vrot.lane.b32.xlu0 %v499, 106
        %v512 = vpop.permute.xlu0 %511
        %vm513 = vcmask 867328
        %v514 = vsel %vm513, %v508, %v510
        %v515 = vsel %vm513, %v510, %v512
        %v519 = vmul.f32 %v502, %v514
        %v520 = vmul.f32 %v502, %v515
        %v521 = vmul.f32 %v502, %v512
        %v522 = vadd.f32 %v495, %v519
        %v523 = vadd.f32 %v496, %v520
        %v524 = vadd.f32 %v497, %v521
        %v525 = vld [vmem:[#allocation2] sm:$0xff]
        %v526 = vld [vmem:[#allocation2 + $0x8] sm:$0xf]
        %527 = vset.pattern.permute.xlu0 8
        %528 = vperm.xlu0 %527, %v319
        %v529 = vpop.permute.xlu0 %528
        %v533 = vcombine.high %v525, %v525
        %534 = vrot.lane.b32.xlu0 %v525, 105
        %v535 = vpop.permute.xlu0 %534
        %536 = vrot.lane.b32.xlu0 %v533, 105
        %v537 = vpop.permute.xlu0 %536
        %538 = vrot.lane.b32.xlu0 %v526, 105
        %v539 = vpop.permute.xlu0 %538
        %vm540 = vcmask 859136
        %v541 = vsel %vm540, %v535, %v537
        %v542 = vsel %vm540, %v537, %v539
        %v546 = vmul.f32 %v529, %v541
        %v547 = vmul.f32 %v529, %v542
        %v548 = vmul.f32 %v529, %v539
        %v549 = vadd.f32 %v522, %v546
        %v550 = vadd.f32 %v523, %v547
        %v551 = vadd.f32 %v524, %v548
        %v552 = vld [vmem:[#allocation2] sm:$0xff]
        %v553 = vld [vmem:[#allocation2 + $0x8] sm:$0xf]
        %554 = vset.pattern.permute.xlu0 9
        %555 = vperm.xlu0 %554, %v319
        %v556 = vpop.permute.xlu0 %555
        %v560 = vcombine.high %v552, %v552
        %561 = vrot.lane.b32.xlu0 %v552, 104
        %v562 = vpop.permute.xlu0 %561
        %563 = vrot.lane.b32.xlu0 %v560, 104
        %v564 = vpop.permute.xlu0 %563
        %565 = vrot.lane.b32.xlu0 %v553, 104
        %v566 = vpop.permute.xlu0 %565
        %vm567 = vcmask 850944
        %v568 = vsel %vm567, %v562, %v564
        %v569 = vsel %vm567, %v564, %v566
        %v573 = vmul.f32 %v556, %v568
        %v574 = vmul.f32 %v556, %v569
        %v575 = vmul.f32 %v556, %v566
        %v576 = vadd.f32 %v549, %v573
        %v577 = vadd.f32 %v550, %v574
        %v578 = vadd.f32 %v551, %v575
        %v579 = vld [vmem:[#allocation2] sm:$0xff]
        %v580 = vld [vmem:[#allocation2 + $0x8] sm:$0xf]
        %581 = vset.pattern.permute.xlu0 10
        %582 = vperm.xlu0 %581, %v319
        %v583 = vpop.permute.xlu0 %582
        %v587 = vcombine.high %v579, %v579
        %588 = vrot.lane.b32.xlu0 %v579, 103
        %v589 = vpop.permute.xlu0 %588
        %590 = vrot.lane.b32.xlu0 %v587, 103
        %v591 = vpop.permute.xlu0 %590
        %592 = vrot.lane.b32.xlu0 %v580, 103
        %v593 = vpop.permute.xlu0 %592
        %vm594 = vcmask 842752
        %v595 = vsel %vm594, %v589, %v591
        %v596 = vsel %vm594, %v591, %v593
        %v600 = vmul.f32 %v583, %v595
        %v601 = vmul.f32 %v583, %v596
        %v602 = vmul.f32 %v583, %v593
        %v603 = vadd.f32 %v576, %v600
        %v604 = vadd.f32 %v577, %v601
        %v605 = vadd.f32 %v578, %v602
        %v606 = vld [vmem:[#allocation2] sm:$0xff]
        %v607 = vld [vmem:[#allocation2 + $0x8] sm:$0xf]
        %608 = vset.pattern.permute.xlu0 11
        %609 = vperm.xlu0 %608, %v319
        %v610 = vpop.permute.xlu0 %609
        %v614 = vcombine.high %v606, %v606
        %615 = vrot.lane.b32.xlu0 %v606, 102
        %v616 = vpop.permute.xlu0 %615
        %617 = vrot.lane.b32.xlu0 %v614, 102
        %v618 = vpop.permute.xlu0 %617
        %619 = vrot.lane.b32.xlu0 %v607, 102
        %v620 = vpop.permute.xlu0 %619
        %vm621 = vcmask 834560
        %v622 = vsel %vm621, %v616, %v618
        %v623 = vsel %vm621, %v618, %v620
        %v627 = vmul.f32 %v610, %v622
        %v628 = vmul.f32 %v610, %v623
        %v629 = vmul.f32 %v610, %v620
        %v630 = vadd.f32 %v603, %v627
        %v631 = vadd.f32 %v604, %v628
        %v632 = vadd.f32 %v605, %v629
        %v633 = vld [vmem:[#allocation2] sm:$0xff]
        %v634 = vld [vmem:[#allocation2 + $0x8] sm:$0xf]
        %635 = vset.pattern.permute.xlu0 12
        %636 = vperm.xlu0 %635, %v319
        %v637 = vpop.permute.xlu0 %636
        %v641 = vcombine.high %v633, %v633
        %642 = vrot.lane.b32.xlu0 %v633, 101
        %v643 = vpop.permute.xlu0 %642
        %644 = vrot.lane.b32.xlu0 %v641, 101
        %v645 = vpop.permute.xlu0 %644
        %646 = vrot.lane.b32.xlu0 %v634, 101
        %v647 = vpop.permute.xlu0 %646
        %vm648 = vcmask 826368
        %v649 = vsel %vm648, %v643, %v645
        %v650 = vsel %vm648, %v645, %v647
        %v654 = vmul.f32 %v637, %v649
        %v655 = vmul.f32 %v637, %v650
        %v656 = vmul.f32 %v637, %v647
        %v657 = vadd.f32 %v630, %v654
        %v658 = vadd.f32 %v631, %v655
        %v659 = vadd.f32 %v632, %v656
        %v660 = vld [vmem:[#allocation2] sm:$0xff]
        %v661 = vld [vmem:[#allocation2 + $0x8] sm:$0xf]
        %662 = vset.pattern.permute.xlu0 13
        %663 = vperm.xlu0 %662, %v319
        %v664 = vpop.permute.xlu0 %663
        %v668 = vcombine.high %v660, %v660
        %669 = vrot.lane.b32.xlu0 %v660, 100
        %v670 = vpop.permute.xlu0 %669
        %671 = vrot.lane.b32.xlu0 %v668, 100
        %v672 = vpop.permute.xlu0 %671
        %673 = vrot.lane.b32.xlu0 %v661, 100
        %v674 = vpop.permute.xlu0 %673
        %vm675 = vcmask 818176
        %v676 = vsel %vm675, %v670, %v672
        %v677 = vsel %vm675, %v672, %v674
        %v681 = vmul.f32 %v664, %v676
        %v682 = vmul.f32 %v664, %v677
        %v683 = vmul.f32 %v664, %v674
        %v684 = vadd.f32 %v657, %v681
        %v685 = vadd.f32 %v658, %v682
        %v686 = vadd.f32 %v659, %v683
        %v687 = vld [vmem:[#allocation2] sm:$0xff]
        %v688 = vld [vmem:[#allocation2 + $0x8] sm:$0xff]
        %689 = vset.pattern.permute.xlu0 14
        %690 = vperm.xlu0 %689, %v319
        %v691 = vpop.permute.xlu0 %690
        %v695 = vcombine.high %v687, %v687
        %v696 = vcombine.high %v688, %v688
        %697 = vrot.lane.b32.xlu0 %v687, 84
        %v698 = vpop.permute.xlu0 %697
        %699 = vrot.lane.b32.xlu0 %v695, 84
        %v700 = vpop.permute.xlu0 %699
        %701 = vrot.lane.b32.xlu0 %v688, 84
        %v702 = vpop.permute.xlu0 %701
        %703 = vrot.lane.b32.xlu0 %v696, 84
        %v704 = vpop.permute.xlu0 %703
        %vm705 = vcmask 687104
        %v706 = vsel %vm705, %v698, %v700
        %v707 = vsel %vm705, %v700, %v702
        %v708 = vsel %vm705, %v702, %v704
        %v712 = vmul.f32 %v691, %v706
        %v713 = vmul.f32 %v691, %v707
        %v714 = vmul.f32 %v691, %v708
        %v715 = vadd.f32 %v684, %v712
        %v716 = vadd.f32 %v685, %v713
        %v717 = vadd.f32 %v686, %v714
        %v718 = vld [vmem:[#allocation2] sm:$0xff]
        %v719 = vld [vmem:[#allocation2 + $0x8] sm:$0xff]
        %720 = vset.pattern.permute.xlu0 15
        %721 = vperm.xlu0 %720, %v319
        %v722 = vpop.permute.xlu0 %721
        %v726 = vcombine.high %v718, %v718
        %v727 = vcombine.high %v719, %v719
        %728 = vrot.lane.b32.xlu0 %v718, 83
        %v729 = vpop.permute.xlu0 %728
        %730 = vrot.lane.b32.xlu0 %v726, 83
        %v731 = vpop.permute.xlu0 %730
        %732 = vrot.lane.b32.xlu0 %v719, 83
        %v733 = vpop.permute.xlu0 %732
        %734 = vrot.lane.b32.xlu0 %v727, 83
        %v735 = vpop.permute.xlu0 %734
        %vm736 = vcmask 678912
        %v737 = vsel %vm736, %v729, %v731
        %v738 = vsel %vm736, %v731, %v733
        %v739 = vsel %vm736, %v733, %v735
        %v743 = vmul.f32 %v722, %v737
        %v744 = vmul.f32 %v722, %v738
        %v745 = vmul.f32 %v722, %v739
        %v746 = vadd.f32 %v715, %v743
        %v747 = vadd.f32 %v716, %v744
        %v748 = vadd.f32 %v717, %v745
        %v749 = vld [vmem:[#allocation2] sm:$0xff]
        %v750 = vld [vmem:[#allocation2 + $0x8] sm:$0xff]
        %751 = vset.pattern.permute.xlu0 16
        %752 = vperm.xlu0 %751, %v319
        %v753 = vpop.permute.xlu0 %752
        %v757 = vcombine.high %v749, %v749
        %v758 = vcombine.high %v750, %v750
        %759 = vrot.lane.b32.xlu0 %v749, 82
        %v760 = vpop.permute.xlu0 %759
        %761 = vrot.lane.b32.xlu0 %v757, 82
        %v762 = vpop.permute.xlu0 %761
        %763 = vrot.lane.b32.xlu0 %v750, 82
        %v764 = vpop.permute.xlu0 %763
        %765 = vrot.lane.b32.xlu0 %v758, 82
        %v766 = vpop.permute.xlu0 %765
        %vm767 = vcmask 670720
        %v768 = vsel %vm767, %v760, %v762
        %v769 = vsel %vm767, %v762, %v764
        %v770 = vsel %vm767, %v764, %v766
        %v774 = vmul.f32 %v753, %v768
        %v775 = vmul.f32 %v753, %v769
        %v776 = vmul.f32 %v753, %v770
        %v777 = vadd.f32 %v746, %v774
        %v778 = vadd.f32 %v747, %v775
        %v779 = vadd.f32 %v748, %v776
        %v780 = vld [vmem:[#allocation2] sm:$0xff]
        %v781 = vld [vmem:[#allocation2 + $0x8] sm:$0xff]
        %782 = vset.pattern.permute.xlu0 17
        %783 = vperm.xlu0 %782, %v319
        %v784 = vpop.permute.xlu0 %783
        %v788 = vcombine.high %v780, %v780
        %v789 = vcombine.high %v781, %v781
        %790 = vrot.lane.b32.xlu0 %v780, 81
        %v791 = vpop.permute.xlu0 %790
        %792 = vrot.lane.b32.xlu0 %v788, 81
        %v793 = vpop.permute.xlu0 %792
        %794 = vrot.lane.b32.xlu0 %v781, 81
        %v795 = vpop.permute.xlu0 %794
        %796 = vrot.lane.b32.xlu0 %v789, 81
        %v797 = vpop.permute.xlu0 %796
        %v798 = vsel %vm211, %v791, %v793
        %v799 = vsel %vm211, %v793, %v795
        %v800 = vsel %vm211, %v795, %v797
        %v804 = vmul.f32 %v784, %v798
        %v805 = vmul.f32 %v784, %v799
        %v806 = vmul.f32 %v784, %v800
        %v807 = vadd.f32 %v777, %v804
        %v808 = vadd.f32 %v778, %v805
        %v809 = vadd.f32 %v779, %v806
        %v810 = vld [vmem:[#allocation2] sm:$0xff]
        %v811 = vld [vmem:[#allocation2 + $0x8] sm:$0xff]
        %812 = vset.pattern.permute.xlu0 18
        %813 = vperm.xlu0 %812, %v319
        %v814 = vpop.permute.xlu0 %813
        %v818 = vcombine.high %v810, %v810
        %v819 = vcombine.high %v811, %v811
        %820 = vrot.lane.b32.xlu0 %v810, 80
        %v821 = vpop.permute.xlu0 %820
        %822 = vrot.lane.b32.xlu0 %v818, 80
        %v823 = vpop.permute.xlu0 %822
        %824 = vrot.lane.b32.xlu0 %v811, 80
        %v825 = vpop.permute.xlu0 %824
        %826 = vrot.lane.b32.xlu0 %v819, 80
        %v827 = vpop.permute.xlu0 %826
        %vm828 = vcmask 654336
        %v829 = vsel %vm828, %v821, %v823
        %v830 = vsel %vm828, %v823, %v825
        %v831 = vsel %vm828, %v825, %v827
        %v835 = vmul.f32 %v814, %v829
        %v836 = vmul.f32 %v814, %v830
        %v837 = vmul.f32 %v814, %v831
        %v838 = vadd.f32 %v807, %v835
        %v839 = vadd.f32 %v808, %v836
        %v840 = vadd.f32 %v809, %v837
        %v841 = vld [vmem:[#allocation2] sm:$0xff]
        %v842 = vld [vmem:[#allocation2 + $0x8] sm:$0xff]
        %843 = vset.pattern.permute.xlu0 19
        %844 = vperm.xlu0 %843, %v319
        %v845 = vpop.permute.xlu0 %844
        %v849 = vcombine.high %v841, %v841
        %v850 = vcombine.high %v842, %v842
        %851 = vrot.lane.b32.xlu0 %v841, 79
        %v852 = vpop.permute.xlu0 %851
        %853 = vrot.lane.b32.xlu0 %v849, 79
        %v854 = vpop.permute.xlu0 %853
        %855 = vrot.lane.b32.xlu0 %v842, 79
        %v856 = vpop.permute.xlu0 %855
        %857 = vrot.lane.b32.xlu0 %v850, 79
        %v858 = vpop.permute.xlu0 %857
        %vm859 = vcmask 646144
        %v860 = vsel %vm859, %v852, %v854
        %v861 = vsel %vm859, %v854, %v856
        %v862 = vsel %vm859, %v856, %v858
        %v866 = vmul.f32 %v845, %v860
        %v867 = vmul.f32 %v845, %v861
        %v868 = vmul.f32 %v845, %v862
        %v869 = vadd.f32 %v838, %v866
        %v870 = vadd.f32 %v839, %v867
        %v871 = vadd.f32 %v840, %v868
        %v872 = vld [vmem:[#allocation2] sm:$0xff]
        %v873 = vld [vmem:[#allocation2 + $0x8] sm:$0xff]
        %874 = vset.pattern.permute.xlu0 20
        %875 = vperm.xlu0 %874, %v319
        %v876 = vpop.permute.xlu0 %875
        %v880 = vcombine.high %v872, %v872
        %v881 = vcombine.high %v873, %v873
        %882 = vrot.lane.b32.xlu0 %v872, 78
        %v883 = vpop.permute.xlu0 %882
        %884 = vrot.lane.b32.xlu0 %v880, 78
        %v885 = vpop.permute.xlu0 %884
        %886 = vrot.lane.b32.xlu0 %v873, 78
        %v887 = vpop.permute.xlu0 %886
        %888 = vrot.lane.b32.xlu0 %v881, 78
        %v889 = vpop.permute.xlu0 %888
        %vm890 = vcmask 637952
        %v891 = vsel %vm890, %v883, %v885
        %v892 = vsel %vm890, %v885, %v887
        %v893 = vsel %vm890, %v887, %v889
        %v897 = vmul.f32 %v876, %v891
        %v898 = vmul.f32 %v876, %v892
        %v899 = vmul.f32 %v876, %v893
        %v900 = vadd.f32 %v869, %v897
        %v901 = vadd.f32 %v870, %v898
        %v902 = vadd.f32 %v871, %v899
        %v903 = vld [vmem:[#allocation2] sm:$0xff]
        %v904 = vld [vmem:[#allocation2 + $0x8] sm:$0xff]
        %905 = vset.pattern.permute.xlu0 21
        %906 = vperm.xlu0 %905, %v319
        %v907 = vpop.permute.xlu0 %906
        %v911 = vcombine.high %v903, %v903
        %v912 = vcombine.high %v904, %v904
        %913 = vrot.lane.b32.xlu0 %v903, 62
        %v914 = vpop.permute.xlu0 %913
        %915 = vrot.lane.b32.xlu0 %v911, 62
        %v916 = vpop.permute.xlu0 %915
        %917 = vrot.lane.b32.xlu0 %v904, 62
        %v918 = vpop.permute.xlu0 %917
        %919 = vrot.lane.b32.xlu0 %v912, 62
        %v920 = vpop.permute.xlu0 %919
        %vm921 = vcmask 506880
        %v922 = vsel %vm921, %v914, %v916
        %v923 = vsel %vm921, %v916, %v918
        %v924 = vsel %vm921, %v918, %v920
        %v928 = vmul.f32 %v907, %v922
        %v929 = vmul.f32 %v907, %v923
        %v930 = vmul.f32 %v907, %v924
        %v931 = vadd.f32 %v900, %v928
        %v932 = vadd.f32 %v901, %v929
        %v933 = vadd.f32 %v902, %v930
        %v934 = vld [vmem:[#allocation2] sm:$0xff]
        %v935 = vld [vmem:[#allocation2 + $0x8] sm:$0xff]
        %936 = vset.pattern.permute.xlu0 22
        %937 = vperm.xlu0 %936, %v319
        %v938 = vpop.permute.xlu0 %937
        %v942 = vcombine.high %v934, %v934
        %v943 = vcombine.high %v935, %v935
        %944 = vrot.lane.b32.xlu0 %v934, 61
        %v945 = vpop.permute.xlu0 %944
        %946 = vrot.lane.b32.xlu0 %v942, 61
        %v947 = vpop.permute.xlu0 %946
        %948 = vrot.lane.b32.xlu0 %v935, 61
        %v949 = vpop.permute.xlu0 %948
        %950 = vrot.lane.b32.xlu0 %v943, 61
        %v951 = vpop.permute.xlu0 %950
        %vm952 = vcmask 498688
        %v953 = vsel %vm952, %v945, %v947
        %v954 = vsel %vm952, %v947, %v949
        %v955 = vsel %vm952, %v949, %v951
        %v959 = vmul.f32 %v938, %v953
        %v960 = vmul.f32 %v938, %v954
        %v961 = vmul.f32 %v938, %v955
        %v962 = vadd.f32 %v931, %v959
        %v963 = vadd.f32 %v932, %v960
        %v964 = vadd.f32 %v933, %v961
        %v965 = vld [vmem:[#allocation2] sm:$0xff]
        %v966 = vld [vmem:[#allocation2 + $0x8] sm:$0xff]
        %967 = vset.pattern.permute.xlu0 23
        %968 = vperm.xlu0 %967, %v319
        %v969 = vpop.permute.xlu0 %968
        %v973 = vcombine.high %v965, %v965
        %v974 = vcombine.high %v966, %v966
        %975 = vrot.lane.b32.xlu0 %v965, 60
        %v976 = vpop.permute.xlu0 %975
        %977 = vrot.lane.b32.xlu0 %v973, 60
        %v978 = vpop.permute.xlu0 %977
        %979 = vrot.lane.b32.xlu0 %v966, 60
        %v980 = vpop.permute.xlu0 %979
        %981 = vrot.lane.b32.xlu0 %v974, 60
        %v982 = vpop.permute.xlu0 %981
        %vm983 = vcmask 490496
        %v984 = vsel %vm983, %v976, %v978
        %v985 = vsel %vm983, %v978, %v980
        %v986 = vsel %vm983, %v980, %v982
        %v990 = vmul.f32 %v969, %v984
        %v991 = vmul.f32 %v969, %v985
        %v992 = vmul.f32 %v969, %v986
        %v993 = vadd.f32 %v962, %v990
        %v994 = vadd.f32 %v963, %v991
        %v995 = vadd.f32 %v964, %v992
        %v996 = vld [vmem:[#allocation2] sm:$0xff]
        %v997 = vld [vmem:[#allocation2 + $0x8] sm:$0xff]
        %998 = vset.pattern.permute.xlu0 24
        %999 = vperm.xlu0 %998, %v319
        %v1000 = vpop.permute.xlu0 %999
        %v1004 = vcombine.high %v996, %v996
        %v1005 = vcombine.high %v997, %v997
        %1006 = vrot.lane.b32.xlu0 %v996, 59
        %v1007 = vpop.permute.xlu0 %1006
        %1008 = vrot.lane.b32.xlu0 %v1004, 59
        %v1009 = vpop.permute.xlu0 %1008
        %1010 = vrot.lane.b32.xlu0 %v997, 59
        %v1011 = vpop.permute.xlu0 %1010
        %1012 = vrot.lane.b32.xlu0 %v1005, 59
        %v1013 = vpop.permute.xlu0 %1012
        %vm1014 = vcmask 482304
        %v1015 = vsel %vm1014, %v1007, %v1009
        %v1016 = vsel %vm1014, %v1009, %v1011
        %v1017 = vsel %vm1014, %v1011, %v1013
        %v1021 = vmul.f32 %v1000, %v1015
        %v1022 = vmul.f32 %v1000, %v1016
        %v1023 = vmul.f32 %v1000, %v1017
        %v1024 = vadd.f32 %v993, %v1021
        %v1025 = vadd.f32 %v994, %v1022
        %v1026 = vadd.f32 %v995, %v1023
        %v1027 = vld [vmem:[#allocation2] sm:$0xff]
        %v1028 = vld [vmem:[#allocation2 + $0x8] sm:$0xff]
        %1029 = vset.pattern.permute.xlu0 25
        %1030 = vperm.xlu0 %1029, %v319
        %v1031 = vpop.permute.xlu0 %1030
        %v1035 = vcombine.high %v1027, %v1027
        %v1036 = vcombine.high %v1028, %v1028
        %1037 = vrot.lane.b32.xlu0 %v1027, 58
        %v1038 = vpop.permute.xlu0 %1037
        %1039 = vrot.lane.b32.xlu0 %v1035, 58
        %v1040 = vpop.permute.xlu0 %1039
        %1041 = vrot.lane.b32.xlu0 %v1028, 58
        %v1042 = vpop.permute.xlu0 %1041
        %1043 = vrot.lane.b32.xlu0 %v1036, 58
        %v1044 = vpop.permute.xlu0 %1043
        %vm1045 = vcmask 474112
        %v1046 = vsel %vm1045, %v1038, %v1040
        %v1047 = vsel %vm1045, %v1040, %v1042
        %v1048 = vsel %vm1045, %v1042, %v1044
        %v1052 = vmul.f32 %v1031, %v1046
        %v1053 = vmul.f32 %v1031, %v1047
        %v1054 = vmul.f32 %v1031, %v1048
        %v1055 = vadd.f32 %v1024, %v1052
        %v1056 = vadd.f32 %v1025, %v1053
        %v1057 = vadd.f32 %v1026, %v1054
        %v1058 = vld [vmem:[#allocation2] sm:$0xff]
        %v1059 = vld [vmem:[#allocation2 + $0x8] sm:$0xff]
        %1060 = vset.pattern.permute.xlu0 26
        %1061 = vperm.xlu0 %1060, %v319
        %v1062 = vpop.permute.xlu0 %1061
        %v1066 = vcombine.high %v1058, %v1058
        %v1067 = vcombine.high %v1059, %v1059
        %1068 = vrot.lane.b32.xlu0 %v1058, 57
        %v1069 = vpop.permute.xlu0 %1068
        %1070 = vrot.lane.b32.xlu0 %v1066, 57
        %v1071 = vpop.permute.xlu0 %1070
        %1072 = vrot.lane.b32.xlu0 %v1059, 57
        %v1073 = vpop.permute.xlu0 %1072
        %1074 = vrot.lane.b32.xlu0 %v1067, 57
        %v1075 = vpop.permute.xlu0 %1074
        %vm1076 = vcmask 465920
        %v1077 = vsel %vm1076, %v1069, %v1071
        %v1078 = vsel %vm1076, %v1071, %v1073
        %v1079 = vsel %vm1076, %v1073, %v1075
        %v1083 = vmul.f32 %v1062, %v1077
        %v1084 = vmul.f32 %v1062, %v1078
        %v1085 = vmul.f32 %v1062, %v1079
        %v1086 = vadd.f32 %v1055, %v1083
        %v1087 = vadd.f32 %v1056, %v1084
        %v1088 = vadd.f32 %v1057, %v1085
        %v1089 = vld [vmem:[#allocation2] sm:$0xff]
        %v1090 = vld [vmem:[#allocation2 + $0x8] sm:$0xff]
        %1091 = vset.pattern.permute.xlu0 27
        %1092 = vperm.xlu0 %1091, %v319
        %v1093 = vpop.permute.xlu0 %1092
        %v1097 = vcombine.high %v1089, %v1089
        %v1098 = vcombine.high %v1090, %v1090
        %1099 = vrot.lane.b32.xlu0 %v1089, 56
        %v1100 = vpop.permute.xlu0 %1099
        %1101 = vrot.lane.b32.xlu0 %v1097, 56
        %v1102 = vpop.permute.xlu0 %1101
        %1103 = vrot.lane.b32.xlu0 %v1090, 56
        %v1104 = vpop.permute.xlu0 %1103
        %1105 = vrot.lane.b32.xlu0 %v1098, 56
        %v1106 = vpop.permute.xlu0 %1105
        %vm1107 = vcmask 457728
        %v1108 = vsel %vm1107, %v1100, %v1102
        %v1109 = vsel %vm1107, %v1102, %v1104
        %v1110 = vsel %vm1107, %v1104, %v1106
        %v1114 = vmul.f32 %v1093, %v1108
        %v1115 = vmul.f32 %v1093, %v1109
        %v1116 = vmul.f32 %v1093, %v1110
        %v1117 = vadd.f32 %v1086, %v1114
        %v1118 = vadd.f32 %v1087, %v1115
        %v1119 = vadd.f32 %v1088, %v1116
        %v1120 = vld [vmem:[#allocation2] sm:$0xff]
        %v1121 = vld [vmem:[#allocation2 + $0x8] sm:$0xff]
        %1122 = vset.pattern.permute.xlu0 28
        %1123 = vperm.xlu0 %1122, %v319
        %v1124 = vpop.permute.xlu0 %1123
        %v1128 = vcombine.high %v1120, %v1120
        %v1129 = vcombine.high %v1121, %v1121
        %1130 = vrot.lane.b32.xlu0 %v1120, 40
        %v1131 = vpop.permute.xlu0 %1130
        %1132 = vrot.lane.b32.xlu0 %v1128, 40
        %v1133 = vpop.permute.xlu0 %1132
        %1134 = vrot.lane.b32.xlu0 %v1121, 40
        %v1135 = vpop.permute.xlu0 %1134
        %1136 = vrot.lane.b32.xlu0 %v1129, 40
        %v1137 = vpop.permute.xlu0 %1136
        %vm1138 = vcmask 326656
        %v1139 = vsel %vm1138, %v1131, %v1133
        %v1140 = vsel %vm1138, %v1133, %v1135
        %v1141 = vsel %vm1138, %v1135, %v1137
        %v1145 = vmul.f32 %v1124, %v1139
        %v1146 = vmul.f32 %v1124, %v1140
        %v1147 = vmul.f32 %v1124, %v1141
        %v1148 = vadd.f32 %v1117, %v1145
        %v1149 = vadd.f32 %v1118, %v1146
        %v1150 = vadd.f32 %v1119, %v1147
        %v1151 = vld [vmem:[#allocation2] sm:$0xff]
        %v1152 = vld [vmem:[#allocation2 + $0x8] sm:$0xff]
        %1153 = vset.pattern.permute.xlu0 29
        %1154 = vperm.xlu0 %1153, %v319
        %v1155 = vpop.permute.xlu0 %1154
        %v1159 = vcombine.high %v1151, %v1151
        %v1160 = vcombine.high %v1152, %v1152
        %1161 = vrot.lane.b32.xlu0 %v1151, 39
        %v1162 = vpop.permute.xlu0 %1161
        %1163 = vrot.lane.b32.xlu0 %v1159, 39
        %v1164 = vpop.permute.xlu0 %1163
        %1165 = vrot.lane.b32.xlu0 %v1152, 39
        %v1166 = vpop.permute.xlu0 %1165
        %1167 = vrot.lane.b32.xlu0 %v1160, 39
        %v1168 = vpop.permute.xlu0 %1167
        %vm1169 = vcmask 318464
        %v1170 = vsel %vm1169, %v1162, %v1164
        %v1171 = vsel %vm1169, %v1164, %v1166
        %v1172 = vsel %vm1169, %v1166, %v1168
        %v1176 = vmul.f32 %v1155, %v1170
        %v1177 = vmul.f32 %v1155, %v1171
        %v1178 = vmul.f32 %v1155, %v1172
        %v1179 = vadd.f32 %v1148, %v1176
        %v1180 = vadd.f32 %v1149, %v1177
        %v1181 = vadd.f32 %v1150, %v1178
        %v1182 = vld [vmem:[#allocation2] sm:$0xff]
        %v1183 = vld [vmem:[#allocation2 + $0x8] sm:$0xff]
        %1184 = vset.pattern.permute.xlu0 30
        %1185 = vperm.xlu0 %1184, %v319
        %v1186 = vpop.permute.xlu0 %1185
        %v1190 = vcombine.high %v1182, %v1182
        %v1191 = vcombine.high %v1183, %v1183
        %1192 = vrot.lane.b32.xlu0 %v1182, 38
        %v1193 = vpop.permute.xlu0 %1192
        %1194 = vrot.lane.b32.xlu0 %v1190, 38
        %v1195 = vpop.permute.xlu0 %1194
        %1196 = vrot.lane.b32.xlu0 %v1183, 38
        %v1197 = vpop.permute.xlu0 %1196
        %1198 = vrot.lane.b32.xlu0 %v1191, 38
        %v1199 = vpop.permute.xlu0 %1198
        %vm1200 = vcmask 310272
        %v1201 = vsel %vm1200, %v1193, %v1195
        %v1202 = vsel %vm1200, %v1195, %v1197
        %v1203 = vsel %vm1200, %v1197, %v1199
        %v1207 = vmul.f32 %v1186, %v1201
        %v1208 = vmul.f32 %v1186, %v1202
        %v1209 = vmul.f32 %v1186, %v1203
        %v1210 = vadd.f32 %v1179, %v1207
        %v1211 = vadd.f32 %v1180, %v1208
        %v1212 = vadd.f32 %v1181, %v1209
        %v1213 = vld [vmem:[#allocation2] sm:$0xff]
        %v1214 = vld [vmem:[#allocation2 + $0x8] sm:$0xff]
        %1215 = vset.pattern.permute.xlu0 31
        %1216 = vperm.xlu0 %1215, %v319
        %v1217 = vpop.permute.xlu0 %1216
        %v1221 = vcombine.high %v1213, %v1213
        %v1222 = vcombine.high %v1214, %v1214
        %1223 = vrot.lane.b32.xlu0 %v1213, 37
        %v1224 = vpop.permute.xlu0 %1223
        %1225 = vrot.lane.b32.xlu0 %v1221, 37
        %v1226 = vpop.permute.xlu0 %1225
        %1227 = vrot.lane.b32.xlu0 %v1214, 37
        %v1228 = vpop.permute.xlu0 %1227
        %1229 = vrot.lane.b32.xlu0 %v1222, 37
        %v1230 = vpop.permute.xlu0 %1229
        %vm1231 = vcmask 302080
        %v1232 = vsel %vm1231, %v1224, %v1226
        %v1233 = vsel %vm1231, %v1226, %v1228
        %v1234 = vsel %vm1231, %v1228, %v1230
        %v1238 = vmul.f32 %v1217, %v1232
        %v1239 = vmul.f32 %v1217, %v1233
        %v1240 = vmul.f32 %v1217, %v1234
        %v1241 = vadd.f32 %v1210, %v1238
        %v1242 = vadd.f32 %v1211, %v1239
        %v1243 = vadd.f32 %v1212, %v1240
        %v1244 = vld [vmem:[#allocation2] sm:$0xff]
        %v1245 = vld [vmem:[#allocation2 + $0x8] sm:$0xff]
        %1246 = vset.pattern.permute.xlu0 32
        %1247 = vperm.xlu0 %1246, %v319
        %v1248 = vpop.permute.xlu0 %1247
        %v1252 = vcombine.high %v1244, %v1244
        %v1253 = vcombine.high %v1245, %v1245
        %1254 = vrot.lane.b32.xlu0 %v1244, 36
        %v1255 = vpop.permute.xlu0 %1254
        %1256 = vrot.lane.b32.xlu0 %v1252, 36
        %v1257 = vpop.permute.xlu0 %1256
        %1258 = vrot.lane.b32.xlu0 %v1245, 36
        %v1259 = vpop.permute.xlu0 %1258
        %1260 = vrot.lane.b32.xlu0 %v1253, 36
        %v1261 = vpop.permute.xlu0 %1260
        %vm1262 = vcmask 293888
        %v1263 = vsel %vm1262, %v1255, %v1257
        %v1264 = vsel %vm1262, %v1257, %v1259
        %v1265 = vsel %vm1262, %v1259, %v1261
        %v1269 = vmul.f32 %v1248, %v1263
        %v1270 = vmul.f32 %v1248, %v1264
        %v1271 = vmul.f32 %v1248, %v1265
        %v1272 = vadd.f32 %v1241, %v1269
        %v1273 = vadd.f32 %v1242, %v1270
        %v1274 = vadd.f32 %v1243, %v1271
        %v1275 = vld [vmem:[#allocation2] sm:$0xff]
        %v1276 = vld [vmem:[#allocation2 + $0x8] sm:$0xff]
        %1277 = vset.pattern.permute.xlu0 33
        %1278 = vperm.xlu0 %1277, %v319
        %v1279 = vpop.permute.xlu0 %1278
        %v1283 = vcombine.high %v1275, %v1275
        %v1284 = vcombine.high %v1276, %v1276
        %1285 = vrot.lane.b32.xlu0 %v1275, 35
        %v1286 = vpop.permute.xlu0 %1285
        %1287 = vrot.lane.b32.xlu0 %v1283, 35
        %v1288 = vpop.permute.xlu0 %1287
        %1289 = vrot.lane.b32.xlu0 %v1276, 35
        %v1290 = vpop.permute.xlu0 %1289
        %1291 = vrot.lane.b32.xlu0 %v1284, 35
        %v1292 = vpop.permute.xlu0 %1291
        %vm1293 = vcmask 285696
        %v1294 = vsel %vm1293, %v1286, %v1288
        %v1295 = vsel %vm1293, %v1288, %v1290
        %v1296 = vsel %vm1293, %v1290, %v1292
        %v1300 = vmul.f32 %v1279, %v1294
        %v1301 = vmul.f32 %v1279, %v1295
        %v1302 = vmul.f32 %v1279, %v1296
        %v1303 = vadd.f32 %v1272, %v1300
        %v1304 = vadd.f32 %v1273, %v1301
        %v1305 = vadd.f32 %v1274, %v1302
        %v1306 = vld [vmem:[#allocation2] sm:$0xff]
        %v1307 = vld [vmem:[#allocation2 + $0x8] sm:$0xff]
        %1308 = vset.pattern.permute.xlu0 34
        %1309 = vperm.xlu0 %1308, %v319
        %v1310 = vpop.permute.xlu0 %1309
        %v1314 = vcombine.high %v1306, %v1306
        %v1315 = vcombine.high %v1307, %v1307
        %1316 = vrot.lane.b32.xlu0 %v1306, 34
        %v1317 = vpop.permute.xlu0 %1316
        %1318 = vrot.lane.b32.xlu0 %v1314, 34
        %v1319 = vpop.permute.xlu0 %1318
        %1320 = vrot.lane.b32.xlu0 %v1307, 34
        %v1321 = vpop.permute.xlu0 %1320
        %1322 = vrot.lane.b32.xlu0 %v1315, 34
        %v1323 = vpop.permute.xlu0 %1322
        %vm1324 = vcmask 277504
        %v1325 = vsel %vm1324, %v1317, %v1319
        %v1326 = vsel %vm1324, %v1319, %v1321
        %v1327 = vsel %vm1324, %v1321, %v1323
        %v1331 = vmul.f32 %v1310, %v1325
        %v1332 = vmul.f32 %v1310, %v1326
        %v1333 = vmul.f32 %v1310, %v1327
        %v1334 = vadd.f32 %v1303, %v1331
        %v1335 = vadd.f32 %v1304, %v1332
        %v1336 = vadd.f32 %v1305, %v1333
        %v1337 = vld [vmem:[#allocation2] sm:$0xff]
        %v1338 = vld [vmem:[#allocation2 + $0x8] sm:$0xff]
        %1339 = vset.pattern.permute.xlu0 35
        %1340 = vperm.xlu0 %1339, %v319
        %v1341 = vpop.permute.xlu0 %1340
        %v1345 = vcombine.high %v1337, %v1337
        %v1346 = vcombine.high %v1338, %v1338
        %1347 = vrot.lane.b32.xlu0 %v1337, 18
        %v1348 = vpop.permute.xlu0 %1347
        %1349 = vrot.lane.b32.xlu0 %v1345, 18
        %v1350 = vpop.permute.xlu0 %1349
        %1351 = vrot.lane.b32.xlu0 %v1338, 18
        %v1352 = vpop.permute.xlu0 %1351
        %1353 = vrot.lane.b32.xlu0 %v1346, 18
        %v1354 = vpop.permute.xlu0 %1353
        %vm1355 = vcmask 146432
        %v1356 = vsel %vm1355, %v1348, %v1350
        %v1357 = vsel %vm1355, %v1350, %v1352
        %v1358 = vsel %vm1355, %v1352, %v1354
        %v1362 = vmul.f32 %v1341, %v1356
        %v1363 = vmul.f32 %v1341, %v1357
        %v1364 = vmul.f32 %v1341, %v1358
        %v1365 = vadd.f32 %v1334, %v1362
        %v1366 = vadd.f32 %v1335, %v1363
        %v1367 = vadd.f32 %v1336, %v1364
        %v1368 = vld [vmem:[#allocation2] sm:$0xff]
        %v1369 = vld [vmem:[#allocation2 + $0x8] sm:$0xff]
        %1370 = vset.pattern.permute.xlu0 36
        %1371 = vperm.xlu0 %1370, %v319
        %v1372 = vpop.permute.xlu0 %1371
        %v1376 = vcombine.high %v1368, %v1368
        %v1377 = vcombine.high %v1369, %v1369
        %1378 = vrot.lane.b32.xlu0 %v1368, 17
        %v1379 = vpop.permute.xlu0 %1378
        %1380 = vrot.lane.b32.xlu0 %v1376, 17
        %v1381 = vpop.permute.xlu0 %1380
        %1382 = vrot.lane.b32.xlu0 %v1369, 17
        %v1383 = vpop.permute.xlu0 %1382
        %1384 = vrot.lane.b32.xlu0 %v1377, 17
        %v1385 = vpop.permute.xlu0 %1384
        %vm1386 = vcmask 138240
        %v1387 = vsel %vm1386, %v1379, %v1381
        %v1388 = vsel %vm1386, %v1381, %v1383
        %v1389 = vsel %vm1386, %v1383, %v1385
        %v1393 = vmul.f32 %v1372, %v1387
        %v1394 = vmul.f32 %v1372, %v1388
        %v1395 = vmul.f32 %v1372, %v1389
        %v1396 = vadd.f32 %v1365, %v1393
        %v1397 = vadd.f32 %v1366, %v1394
        %v1398 = vadd.f32 %v1367, %v1395
        %v1399 = vld [vmem:[#allocation2] sm:$0xff]
        %v1400 = vld [vmem:[#allocation2 + $0x8] sm:$0xff]
        %1401 = vset.pattern.permute.xlu0 37
        %1402 = vperm.xlu0 %1401, %v319
        %v1403 = vpop.permute.xlu0 %1402
        %v1407 = vcombine.high %v1399, %v1399
        %v1408 = vcombine.high %v1400, %v1400
        %1409 = vrot.lane.b32.xlu0 %v1399, 16
        %v1410 = vpop.permute.xlu0 %1409
        %1411 = vrot.lane.b32.xlu0 %v1407, 16
        %v1412 = vpop.permute.xlu0 %1411
        %1413 = vrot.lane.b32.xlu0 %v1400, 16
        %v1414 = vpop.permute.xlu0 %1413
        %1415 = vrot.lane.b32.xlu0 %v1408, 16
        %v1416 = vpop.permute.xlu0 %1415
        %vm1417 = vcmask 130048
        %v1418 = vsel %vm1417, %v1410, %v1412
        %v1419 = vsel %vm1417, %v1412, %v1414
        %v1420 = vsel %vm1417, %v1414, %v1416
        %v1424 = vmul.f32 %v1403, %v1418
        %v1425 = vmul.f32 %v1403, %v1419
        %v1426 = vmul.f32 %v1403, %v1420
        %v1427 = vadd.f32 %v1396, %v1424
        %v1428 = vadd.f32 %v1397, %v1425
        %v1429 = vadd.f32 %v1398, %v1426
        %v1430 = vld [vmem:[#allocation2] sm:$0xff]
        %v1431 = vld [vmem:[#allocation2 + $0x8] sm:$0xff]
        %1432 = vset.pattern.permute.xlu0 38
        %1433 = vperm.xlu0 %1432, %v319
        %v1434 = vpop.permute.xlu0 %1433
        %v1438 = vcombine.high %v1430, %v1430
        %v1439 = vcombine.high %v1431, %v1431
        %1440 = vrot.lane.b32.xlu0 %v1430, 15
        %v1441 = vpop.permute.xlu0 %1440
        %1442 = vrot.lane.b32.xlu0 %v1438, 15
        %v1443 = vpop.permute.xlu0 %1442
        %1444 = vrot.lane.b32.xlu0 %v1431, 15
        %v1445 = vpop.permute.xlu0 %1444
        %1446 = vrot.lane.b32.xlu0 %v1439, 15
        %v1447 = vpop.permute.xlu0 %1446
        %vm1448 = vcmask 121856
        %v1449 = vsel %vm1448, %v1441, %v1443
        %v1450 = vsel %vm1448, %v1443, %v1445
        %v1451 = vsel %vm1448, %v1445, %v1447
        %v1455 = vmul.f32 %v1434, %v1449
        %v1456 = vmul.f32 %v1434, %v1450
        %v1457 = vmul.f32 %v1434, %v1451
        %v1458 = vadd.f32 %v1427, %v1455
        %v1459 = vadd.f32 %v1428, %v1456
        %v1460 = vadd.f32 %v1429, %v1457
        %v1461 = vld [vmem:[#allocation2] sm:$0xff]
        %v1462 = vld [vmem:[#allocation2 + $0x8] sm:$0xff]
        %1463 = vset.pattern.permute.xlu0 39
        %1464 = vperm.xlu0 %1463, %v319
        %v1465 = vpop.permute.xlu0 %1464
        %v1469 = vcombine.high %v1461, %v1461
        %v1470 = vcombine.high %v1462, %v1462
        %1471 = vrot.lane.b32.xlu0 %v1461, 14
        %v1472 = vpop.permute.xlu0 %1471
        %1473 = vrot.lane.b32.xlu0 %v1469, 14
        %v1474 = vpop.permute.xlu0 %1473
        %1475 = vrot.lane.b32.xlu0 %v1462, 14
        %v1476 = vpop.permute.xlu0 %1475
        %1477 = vrot.lane.b32.xlu0 %v1470, 14
        %v1478 = vpop.permute.xlu0 %1477
        %vm1479 = vcmask 113664
        %v1480 = vsel %vm1479, %v1472, %v1474
        %v1481 = vsel %vm1479, %v1474, %v1476
        %v1482 = vsel %vm1479, %v1476, %v1478
        %v1486 = vmul.f32 %v1465, %v1480
        %v1487 = vmul.f32 %v1465, %v1481
        %v1488 = vmul.f32 %v1465, %v1482
        %v1489 = vadd.f32 %v1458, %v1486
        %v1490 = vadd.f32 %v1459, %v1487
        %v1491 = vadd.f32 %v1460, %v1488
        %v1492 = vld [vmem:[#allocation2] sm:$0xff]
        %v1493 = vld [vmem:[#allocation2 + $0x8] sm:$0xff]
        %1494 = vset.pattern.permute.xlu0 40
        %1495 = vperm.xlu0 %1494, %v319
        %v1496 = vpop.permute.xlu0 %1495
        %v1500 = vcombine.high %v1492, %v1492
        %v1501 = vcombine.high %v1493, %v1493
        %1502 = vrot.lane.b32.xlu0 %v1492, 13
        %v1503 = vpop.permute.xlu0 %1502
        %1504 = vrot.lane.b32.xlu0 %v1500, 13
        %v1505 = vpop.permute.xlu0 %1504
        %1506 = vrot.lane.b32.xlu0 %v1493, 13
        %v1507 = vpop.permute.xlu0 %1506
        %1508 = vrot.lane.b32.xlu0 %v1501, 13
        %v1509 = vpop.permute.xlu0 %1508
        %vm1510 = vcmask 105472
        %v1511 = vsel %vm1510, %v1503, %v1505
        %v1512 = vsel %vm1510, %v1505, %v1507
        %v1513 = vsel %vm1510, %v1507, %v1509
        %v1517 = vmul.f32 %v1496, %v1511
        %v1518 = vmul.f32 %v1496, %v1512
        %v1519 = vmul.f32 %v1496, %v1513
        %v1520 = vadd.f32 %v1489, %v1517
        %v1521 = vadd.f32 %v1490, %v1518
        %v1522 = vadd.f32 %v1491, %v1519
        %v1523 = vld [vmem:[#allocation2] sm:$0xff]
        %v1524 = vld [vmem:[#allocation2 + $0x8] sm:$0xff]
        %1525 = vset.pattern.permute.xlu0 41
        %1526 = vperm.xlu0 %1525, %v319
        %v1527 = vpop.permute.xlu0 %1526
        %v1531 = vcombine.high %v1523, %v1523
        %v1532 = vcombine.high %v1524, %v1524
        %1533 = vrot.lane.b32.xlu0 %v1523, 12
        %v1534 = vpop.permute.xlu0 %1533
        %1535 = vrot.lane.b32.xlu0 %v1531, 12
        %v1536 = vpop.permute.xlu0 %1535
        %1537 = vrot.lane.b32.xlu0 %v1524, 12
        %v1538 = vpop.permute.xlu0 %1537
        %1539 = vrot.lane.b32.xlu0 %v1532, 12
        %v1540 = vpop.permute.xlu0 %1539
        %vm1541 = vcmask 97280
        %v1542 = vsel %vm1541, %v1534, %v1536
        %v1543 = vsel %vm1541, %v1536, %v1538
        %v1544 = vsel %vm1541, %v1538, %v1540
        %v1548 = vmul.f32 %v1527, %v1542
        %v1549 = vmul.f32 %v1527, %v1543
        %v1550 = vmul.f32 %v1527, %v1544
        %v1551 = vadd.f32 %v1520, %v1548
        %v1552 = vadd.f32 %v1521, %v1549
        %v1553 = vadd.f32 %v1522, %v1550
        %v1554 = vld [vmem:[#allocation2 + $0x4] sm:$0xff]
        %v1555 = vld [vmem:[#allocation2 + $0xc] sm:$0xf]
        %1556 = vset.pattern.permute.xlu0 42
        %1557 = vperm.xlu0 %1556, %v319
        %v1558 = vpop.permute.xlu0 %1557
        %v1562 = vcombine.high %v1554, %v1554
        %1563 = vrot.lane.b32.xlu0 %v1554, 124
        %v1564 = vpop.permute.xlu0 %1563
        %1565 = vrot.lane.b32.xlu0 %v1562, 124
        %v1566 = vpop.permute.xlu0 %1565
        %1567 = vrot.lane.b32.xlu0 %v1555, 124
        %v1568 = vpop.permute.xlu0 %1567
        %v1569 = vsel %vm432, %v1564, %v1566
        %v1570 = vsel %vm432, %v1566, %v1568
        %v1574 = vmul.f32 %v1558, %v1569
        %v1575 = vmul.f32 %v1558, %v1570
        %v1576 = vmul.f32 %v1558, %v1568
        %v1577 = vadd.f32 %v1551, %v1574
        %v1578 = vadd.f32 %v1552, %v1575
        %v1579 = vadd.f32 %v1553, %v1576
        %v1580 = vld [vmem:[#allocation2 + $0x4] sm:$0xff]
        %v1581 = vld [vmem:[#allocation2 + $0xc] sm:$0xf]
        %1582 = vset.pattern.permute.xlu0 43
        %1583 = vperm.xlu0 %1582, %v319
        %v1584 = vpop.permute.xlu0 %1583
        %v1588 = vcombine.high %v1580, %v1580
        %1589 = vrot.lane.b32.xlu0 %v1580, 123
        %v1590 = vpop.permute.xlu0 %1589
        %1591 = vrot.lane.b32.xlu0 %v1588, 123
        %v1592 = vpop.permute.xlu0 %1591
        %1593 = vrot.lane.b32.xlu0 %v1581, 123
        %v1594 = vpop.permute.xlu0 %1593
        %v1595 = vsel %vm459, %v1590, %v1592
        %v1596 = vsel %vm459, %v1592, %v1594
        %v1600 = vmul.f32 %v1584, %v1595
        %v1601 = vmul.f32 %v1584, %v1596
        %v1602 = vmul.f32 %v1584, %v1594
        %v1603 = vadd.f32 %v1577, %v1600
        %v1604 = vadd.f32 %v1578, %v1601
        %v1605 = vadd.f32 %v1579, %v1602
        %v1606 = vld [vmem:[#allocation2 + $0x4] sm:$0xff]
        %v1607 = vld [vmem:[#allocation2 + $0xc] sm:$0xf]
        %1608 = vset.pattern.permute.xlu0 44
        %1609 = vperm.xlu0 %1608, %v319
        %v1610 = vpop.permute.xlu0 %1609
        %v1614 = vcombine.high %v1606, %v1606
        %1615 = vrot.lane.b32.xlu0 %v1606, 122
        %v1616 = vpop.permute.xlu0 %1615
        %1617 = vrot.lane.b32.xlu0 %v1614, 122
        %v1618 = vpop.permute.xlu0 %1617
        %1619 = vrot.lane.b32.xlu0 %v1607, 122
        %v1620 = vpop.permute.xlu0 %1619
        %v1621 = vsel %vm486, %v1616, %v1618
        %v1622 = vsel %vm486, %v1618, %v1620
        %v1626 = vmul.f32 %v1610, %v1621
        %v1627 = vmul.f32 %v1610, %v1622
        %v1628 = vmul.f32 %v1610, %v1620
        %v1629 = vadd.f32 %v1603, %v1626
        %v1630 = vadd.f32 %v1604, %v1627
        %v1631 = vadd.f32 %v1605, %v1628
        %v1632 = vld [vmem:[#allocation2 + $0x4] sm:$0xff]
        %v1633 = vld [vmem:[#allocation2 + $0xc] sm:$0xf]
        %1634 = vset.pattern.permute.xlu0 45
        %1635 = vperm.xlu0 %1634, %v319
        %v1636 = vpop.permute.xlu0 %1635
        %v1640 = vcombine.high %v1632, %v1632
        %1641 = vrot.lane.b32.xlu0 %v1632, 121
        %v1642 = vpop.permute.xlu0 %1641
        %1643 = vrot.lane.b32.xlu0 %v1640, 121
        %v1644 = vpop.permute.xlu0 %1643
        %1645 = vrot.lane.b32.xlu0 %v1633, 121
        %v1646 = vpop.permute.xlu0 %1645
        %vm1647 = vcmask 990208
        %v1648 = vsel %vm1647, %v1642, %v1644
        %v1649 = vsel %vm1647, %v1644, %v1646
        %v1653 = vmul.f32 %v1636, %v1648
        %v1654 = vmul.f32 %v1636, %v1649
        %v1655 = vmul.f32 %v1636, %v1646
        %v1656 = vadd.f32 %v1629, %v1653
        %v1657 = vadd.f32 %v1630, %v1654
        %v1658 = vadd.f32 %v1631, %v1655
        %v1659 = vld [vmem:[#allocation2 + $0x4] sm:$0xff]
        %v1660 = vld [vmem:[#allocation2 + $0xc] sm:$0xf]
        %1661 = vset.pattern.permute.xlu0 46
        %1662 = vperm.xlu0 %1661, %v319
        %v1663 = vpop.permute.xlu0 %1662
        %v1667 = vcombine.high %v1659, %v1659
        %1668 = vrot.lane.b32.xlu0 %v1659, 120
        %v1669 = vpop.permute.xlu0 %1668
        %1670 = vrot.lane.b32.xlu0 %v1667, 120
        %v1671 = vpop.permute.xlu0 %1670
        %1672 = vrot.lane.b32.xlu0 %v1660, 120
        %v1673 = vpop.permute.xlu0 %1672
        %vm1674 = vcmask 982016
        %v1675 = vsel %vm1674, %v1669, %v1671
        %v1676 = vsel %vm1674, %v1671, %v1673
        %v1680 = vmul.f32 %v1663, %v1675
        %v1681 = vmul.f32 %v1663, %v1676
        %v1682 = vmul.f32 %v1663, %v1673
        %v1683 = vadd.f32 %v1656, %v1680
        %v1684 = vadd.f32 %v1657, %v1681
        %v1685 = vadd.f32 %v1658, %v1682
        %v1686 = vld [vmem:[#allocation2 + $0x4] sm:$0xff]
        %v1687 = vld [vmem:[#allocation2 + $0xc] sm:$0xf]
        %1688 = vset.pattern.permute.xlu0 47
        %1689 = vperm.xlu0 %1688, %v319
        %v1690 = vpop.permute.xlu0 %1689
        %v1694 = vcombine.high %v1686, %v1686
        %1695 = vrot.lane.b32.xlu0 %v1686, 119
        %v1696 = vpop.permute.xlu0 %1695
        %1697 = vrot.lane.b32.xlu0 %v1694, 119
        %v1698 = vpop.permute.xlu0 %1697
        %1699 = vrot.lane.b32.xlu0 %v1687, 119
        %v1700 = vpop.permute.xlu0 %1699
        %vm1701 = vcmask 973824
        %v1702 = vsel %vm1701, %v1696, %v1698
        %v1703 = vsel %vm1701, %v1698, %v1700
        %v1707 = vmul.f32 %v1690, %v1702
        %v1708 = vmul.f32 %v1690, %v1703
        %v1709 = vmul.f32 %v1690, %v1700
        %v1710 = vadd.f32 %v1683, %v1707
        %v1711 = vadd.f32 %v1684, %v1708
        %v1712 = vadd.f32 %v1685, %v1709
        %v1713 = vld [vmem:[#allocation2 + $0x4] sm:$0xff]
        %v1714 = vld [vmem:[#allocation2 + $0xc] sm:$0xf]
        %1715 = vset.pattern.permute.xlu0 48
        %1716 = vperm.xlu0 %1715, %v319
        %v1717 = vpop.permute.xlu0 %1716
        %v1721 = vcombine.high %v1713, %v1713
        %1722 = vrot.lane.b32.xlu0 %v1713, 118
        %v1723 = vpop.permute.xlu0 %1722
        %1724 = vrot.lane.b32.xlu0 %v1721, 118
        %v1725 = vpop.permute.xlu0 %1724
        %1726 = vrot.lane.b32.xlu0 %v1714, 118
        %v1727 = vpop.permute.xlu0 %1726
        %vm1728 = vcmask 965632
        %v1729 = vsel %vm1728, %v1723, %v1725
        %v1730 = vsel %vm1728, %v1725, %v1727
        %v1734 = vmul.f32 %v1717, %v1729
        %v1735 = vmul.f32 %v1717, %v1730
        %v1736 = vmul.f32 %v1717, %v1727
        %v1737 = vadd.f32 %v1710, %v1734
        %v1738 = vadd.f32 %v1711, %v1735
        %v1739 = vadd.f32 %v1712, %v1736
        %v1740 = vld [vmem:[%s2] sm:$0xff]
        %vm1741 = vcmask 31744
        %v1743 = vsel %vm1741, %v1740, 0
        %v1746 = vsel %vm188, %v1737, 0
        %v1749 = vsel %vm188, %v1738, 0
        %v1752 = vsel %vm188, %v1739, 0
        %1754 = vmatprep.subr.mxu0 %v1749
        %1755 = vmatpush1.msra.mxu0 %v1746
        %1756 = vmatprep.subr.mxu0 0.0
        %1757 = vmatpush1.msra.mxu0 0.0
        %1758 = vmatprep.subr.mxu0 0.0
        %1759 = vmatpush1.msra.mxu0 0.0
        %1760 = vmatprep.subr.mxu0 0.0
        %1761 = vmatpush1.msra.mxu0 0.0
        %1762 = vmatprep.subr.mxu0 0.0
        %1763 = vmatpush1.msra.mxu0 0.0
        %1764 = vmatprep.subr.mxu0 0.0
        %1765 = vmatpush1.msra.mxu0 0.0
        %1766 = vmatprep.subr.mxu0 0.0
        %1767 = vmatpush1.msra.mxu0 0.0
        %1768 = vmatprep.subr.mxu0 0.0
        %1769 = vmatpush1.msra.mxu0 0.0
        %1770 = vmatprep.subr.mxu0 0.0
        %1771 = vmatpush1.msra.mxu0 0.0
        %1772 = vmatprep.subr.mxu0 0.0
        %1773 = vmatpush1.msra.mxu0 0.0
        %1774 = vmatprep.subr.mxu0 0.0
        %1775 = vmatpush1.msra.mxu0 0.0
        %1776 = vmatprep.subr.mxu0 0.0
        %1777 = vmatpush1.msra.mxu0 0.0
        %1778 = vmatprep.subr.mxu0 0.0
        %1779 = vmatpush1.msra.mxu0 0.0
        %1780 = vmatprep.subr.mxu0 0.0
        %1781 = vmatpush1.msra.mxu0 0.0
        %1782 = vmatprep.subr.mxu0 0.0
        %1783 = vmatpush1.msra.mxu0 0.0
        %1784 = vmatprep.subr.mxu0 0.0
        %1785 = vmatpush1.msra.mxu0 0.0
        %1786 = vmatprep.subr.mxu0 0.0
        %1787 = vmatpush1.msra.mxu0 0.0
        %1788 = vmatprep.subr.mxu0 0.0
        %1789 = vmatpush1.msra.mxu0 0.0
        %1790 = vmatprep.subr.mxu0 0.0
        %1791 = vmatpush1.msra.mxu0 0.0
        %1792 = vmatprep.subr.mxu0 0.0
        %1793 = vmatpush1.msra.mxu0 0.0
        %1794 = vmatprep.subr.mxu0 0.0
        %1795 = vmatpush1.msra.mxu0 0.0
        %1796 = vmatprep.subr.mxu0 0.0
        %1797 = vmatpush1.msra.mxu0 0.0
        %1798 = vmatprep.subr.mxu0 0.0
        %1799 = vmatpush1.msra.mxu0 0.0
        %1800 = vmatprep.subr.mxu0 0.0
        %1801 = vmatpush1.msra.mxu0 0.0
        %1802 = vmatprep.subr.mxu0 0.0
        %1803 = vmatpush1.msra.mxu0 0.0
        %1804 = vmatprep.subr.mxu0 0.0
        %1805 = vmatpush1.msra.mxu0 0.0
        %1806 = vmatprep.subr.mxu0 0.0
        %1807 = vmatpush1.msra.mxu0 0.0
        %1808 = vmatprep.subr.mxu0 0.0
        %1809 = vmatpush1.msra.mxu0 0.0
        %1810 = vmatprep.subr.mxu0 0.0
        %1811 = vmatpush1.msra.mxu0 0.0
        %1812 = vmatprep.subr.mxu0 0.0
        %1813 = vmatpush1.msra.mxu0 0.0
        %1814 = vmatprep.subr.mxu0 0.0
        %1815 = vmatpush1.msra.mxu0 0.0
        %1816 = vmatprep.subr.mxu0 0.0
        %1817 = vmatpush1.msra.mxu0 0.0
        %1818 = vmatprep.mubr.f32.mxu0 0.0
        %1819 = vmatmul.mubr.f32.gmra.mrb[0].mxu0 %v1743
        %v1820 = vpop.f32.mrb[0].mxu0
        %v1821 = vadd.f32 0.0, %v1820
        %v1822 = vpop.f32.mrb[0].mxu0
        %v1823 = vadd.f32 0.0, %v1822
        %1824 = vdwg.mxu0
        %1825 = vmatprep.subr.mxu0 0.0
        %1826 = vmatpush1.msra.mxu0 %v1752
        %1827 = vmatprep.subr.mxu0 0.0
        %1828 = vmatpush1.msra.mxu0 0.0
        %1829 = vmatprep.subr.mxu0 0.0
        %1830 = vmatpush1.msra.mxu0 0.0
        %1831 = vmatprep.subr.mxu0 0.0
        %1832 = vmatpush1.msra.mxu0 0.0
        %1833 = vmatprep.subr.mxu0 0.0
        %1834 = vmatpush1.msra.mxu0 0.0
        %1835 = vmatprep.subr.mxu0 0.0
        %1836 = vmatpush1.msra.mxu0 0.0
        %1837 = vmatprep.subr.mxu0 0.0
        %1838 = vmatpush1.msra.mxu0 0.0
        %1839 = vmatprep.subr.mxu0 0.0
        %1840 = vmatpush1.msra.mxu0 0.0
        %1841 = vmatprep.subr.mxu0 0.0
        %1842 = vmatpush1.msra.mxu0 0.0
        %1843 = vmatprep.subr.mxu0 0.0
        %1844 = vmatpush1.msra.mxu0 0.0
        %1845 = vmatprep.subr.mxu0 0.0
        %1846 = vmatpush1.msra.mxu0 0.0
        %1847 = vmatprep.subr.mxu0 0.0
        %1848 = vmatpush1.msra.mxu0 0.0
        %1849 = vmatprep.subr.mxu0 0.0
        %1850 = vmatpush1.msra.mxu0 0.0
        %1851 = vmatprep.subr.mxu0 0.0
        %1852 = vmatpush1.msra.mxu0 0.0
        %1853 = vmatprep.subr.mxu0 0.0
        %1854 = vmatpush1.msra.mxu0 0.0
        %1855 = vmatprep.subr.mxu0 0.0
        %1856 = vmatpush1.msra.mxu0 0.0
        %1857 = vmatprep.subr.mxu0 0.0
        %1858 = vmatpush1.msra.mxu0 0.0
        %1859 = vmatprep.subr.mxu0 0.0
        %1860 = vmatpush1.msra.mxu0 0.0
        %1861 = vmatprep.subr.mxu0 0.0
        %1862 = vmatpush1.msra.mxu0 0.0
        %1863 = vmatprep.subr.mxu0 0.0
        %1864 = vmatpush1.msra.mxu0 0.0
        %1865 = vmatprep.subr.mxu0 0.0
        %1866 = vmatpush1.msra.mxu0 0.0
        %1867 = vmatprep.subr.mxu0 0.0
        %1868 = vmatpush1.msra.mxu0 0.0
        %1869 = vmatprep.subr.mxu0 0.0
        %1870 = vmatpush1.msra.mxu0 0.0
        %1871 = vmatprep.subr.mxu0 0.0
        %1872 = vmatpush1.msra.mxu0 0.0
        %1873 = vmatprep.subr.mxu0 0.0
        %1874 = vmatpush1.msra.mxu0 0.0
        %1875 = vmatprep.subr.mxu0 0.0
        %1876 = vmatpush1.msra.mxu0 0.0
        %1877 = vmatprep.subr.mxu0 0.0
        %1878 = vmatpush1.msra.mxu0 0.0
        %1879 = vmatprep.subr.mxu0 0.0
        %1880 = vmatpush1.msra.mxu0 0.0
        %1881 = vmatprep.subr.mxu0 0.0
        %1882 = vmatpush1.msra.mxu0 0.0
        %1883 = vmatprep.subr.mxu0 0.0
        %1884 = vmatpush1.msra.mxu0 0.0
        %1885 = vmatprep.subr.mxu0 0.0
        %1886 = vmatpush1.msra.mxu0 0.0
        %1887 = vmatprep.subr.mxu0 0.0
        %1888 = vmatpush1.msra.mxu0 0.0
        %1889 = vmatprep.mubr.f32.mxu0 0.0
        %1890 = vmatmul.mubr.f32.gmra.mrb[0].mxu0 %v1743
        %v1891 = vpop.f32.mrb[0].mxu0
        %v1892 = vadd.f32 0.0, %v1891
        %v1893 = vpop.f32.mrb[0].mxu0
        %1894 = vdwg.mxu0
        %1895 = vst.msk [vmem:[%s186] sm:$0xff] %vm1417, %v1821
        %1897 = vrot.lane.b32.xlu0 %v1821, 122
        %v1898 = vpop.permute.xlu0 %1897
        %vm1900 = vcmask 261248
        %1901 = vst.msk [vmem:[%s186] sm:$0xff] %vm1900, %v1898
        %1902 = vrot.lane.b32.xlu0 %v1821, 116
        %v1903 = vpop.permute.xlu0 %1902
        %vm1905 = vcmask 392448
        %1906 = vst.msk [vmem:[%s186] sm:$0xff] %vm1905, %v1903
        %1907 = vrot.lane.b32.xlu0 %v1821, 110
        %v1908 = vpop.permute.xlu0 %1907
        %vm1910 = vcmask 523648
        %1911 = vst.msk [vmem:[%s186] sm:$0xff] %vm1910, %v1908
        %1912 = vrot.lane.b32.xlu0 %v1821, 104
        %v1913 = vpop.permute.xlu0 %1912
        %vm1915 = vcmask 654848
        %1916 = vst.msk [vmem:[%s186] sm:$0xff] %vm1915, %v1913
        %1917 = vrot.lane.b32.xlu0 %v1821, 98
        %v1918 = vpop.permute.xlu0 %1917
        %vm1920 = vcmask 786048
        %1921 = vst.msk [vmem:[%s186] sm:$0xff] %vm1920, %v1918
        %1923 = vrot.lane.b32.xlu0 %v1823, 92
        %v1924 = vpop.permute.xlu0 %1923
        %vm1926 = vcmask 917248
        %1927 = vst.msk [vmem:[%s186] sm:$0xff] %vm1926, %v1924
        %1928 = vrot.lane.b32.xlu0 %v1823, 86
        %v1929 = vpop.permute.xlu0 %1928
        %vm1931 = vcmask 1048448
        %1932 = vst.msk [vmem:[%s186] sm:$0xff] %vm1931, %v1929
        %1933 = vrot.lane.b32.xlu0 %v1823, 80
        %v1934 = vpop.permute.xlu0 %1933
        %1936 = vst.msk [vmem:[%s186 + $0x8] sm:$0xff] %vm1417, %v1934
        %1937 = vrot.lane.b32.xlu0 %v1823, 74
        %v1938 = vpop.permute.xlu0 %1937
        %1940 = vst.msk [vmem:[%s186 + $0x8] sm:$0xff] %vm1900, %v1938
        %1941 = vrot.lane.b32.xlu0 %v1823, 68
        %v1942 = vpop.permute.xlu0 %1941
        %1944 = vst.msk [vmem:[%s186 + $0x8] sm:$0xff] %vm1905, %v1942
        %1946 = vrot.lane.b32.xlu0 %v1823, 62
        %v1947 = vpop.permute.xlu0 %1946
        %1948 = vrot.lane.b32.xlu0 %v1892, 62
        %v1949 = vpop.permute.xlu0 %1948
        %v1950 = vsel %vm921, %v1947, %v1949
        %1952 = vst.msk [vmem:[%s186 + $0x8] sm:$0xff] %vm1910, %v1950
        %1953 = vrot.lane.b32.xlu0 %v1892, 56
        %v1954 = vpop.permute.xlu0 %1953
        %1956 = vst.msk [vmem:[%s186 + $0x8] sm:$0xff] %vm1915, %v1954
        %1957 = vrot.lane.b32.xlu0 %v1892, 50
        %v1958 = vpop.permute.xlu0 %1957
        %1960 = vst.msk [vmem:[%s186 + $0x8] sm:$0xff] %vm1920, %v1958
        %1961 = vrot.lane.b32.xlu0 %v1892, 44
        %v1962 = vpop.permute.xlu0 %1961
        %1964 = vst.msk [vmem:[%s186 + $0x8] sm:$0xff] %vm1926, %v1962
        %1965 = vrot.lane.b32.xlu0 %v1892, 38
        %v1966 = vpop.permute.xlu0 %1965
        %1968 = vst.msk [vmem:[%s186 + $0x8] sm:$0xff] %vm1931, %v1966
        %s1969 = sand.u32 %s96, 1
        %s1970 = scalar_lea.sflag [#allocation5], %s1969
        %s1971 = sand.u32 %s96, 1
        %s1972 = smul.addr %s1971, 16
        %s1973 = scalar_lea.vmem [#allocation6], %s1972
        // Predicated region
        $region37: #{tpu_custom_call.1} parent=31 // pred_check
          %p1974 = pneg %p106
        $region38: #{tpu_custom_call.1} parent=31 // pred_check_branch
          %1976 = sbr.rel (%p1974) target = $region40
        $region39: #{tpu_custom_call.1} parent=31 // pred_region
          %s1978 = ssub.s32 256, 256
          %1979 = vsyncadd %s1970, %s1978
          %s1980 = smul.addr %s20, 2
          %s1981 = smul.addr %s1980, 128
          %s1982 = scalar_lea.hbm %s3, %s1981
          %s1984 = sshll.u32 %s1973, 4
          %s1985 = int_to_ptr.vmem [resolvable:$true] %s1984
          %1987 = dma.vmem_to_hbm [thread:$0]  %s1985, 256, %s1982, %s1970
        $region40: #{tpu_custom_call.1} parent=31 // pred_fallthru
          _
      $region32: #{tpu_custom_call.1} parent=5 // pred_fallthru
        _
      %p1988 = scmp.le.s32.totalorder 2, %s15
      // Predicated region
      $region41: #{tpu_custom_call.1} parent=5 // pred_check
        %p1989 = pneg %p1988
      $region42: #{tpu_custom_call.1} parent=5 // pred_check_branch
        %1991 = sbr.rel (%p1989) target = $region44
      $region43: #{tpu_custom_call.1} parent=5 // pred_region
        %s1992 = ssub.s32 %s15, 2
        // Predicated region
        $region45: #{tpu_custom_call.1} parent=43 // pred_check
          %p1993 = pneg %p112
        $region46: #{tpu_custom_call.1} parent=43 // pred_check_branch
          %1995 = sbr.rel (%p1993) target = $region48
        $region47: #{tpu_custom_call.1} parent=43 // pred_region
          %s1996 = sand.u32 %s97, 1
          %s1997 = scalar_lea.sflag [#allocation5], %s1996
          %s1998 = sand.u32 %s97, 1
          %s1999 = smul.addr %s1998, 16
          %s2000 = scalar_lea.vmem [#allocation6], %s1999
          %2001 = dma.done %s1997, 256
        $region48: #{tpu_custom_call.1} parent=43 // pred_fallthru
          _
      $region44: #{tpu_custom_call.1} parent=5 // pred_fallthru
        _
    $region6: #{tpu_custom_call.1} parent=1 // loop_footer
      %s19 = sadd.s32 1, %s15
    $region7: #{tpu_custom_call.1} parent=1 // loop_footer_branch
      %14 = sbr.rel target = $region3
    $region8: #{tpu_custom_call.1} parent=1 // loop_exit
      _
    %2002 = vsyncpa [#allocation4], 1
    %s2003 = scalar_lea.sflag [#allocation4], 1
    %2004 = vsyncpa %s2003, 1
    %2005 = vsyncpa [#allocation5], 1
    %s2006 = scalar_lea.sflag [#allocation5], 1
    %2007 = vsyncpa %s2006, 1

</llo_original>
